<compile_context>
chip_gen: v7x
topology: tpu7x:2x2x1
jax: 0.10.0
libtpu: 0.0.40
codegen_flags: <defaults>
</compile_context>

<pallas_src>
import functools
import math

import jax
import jax.numpy as jnp
from jax import lax
from jax.experimental import pallas as pl
from jax.experimental.pallas import tpu as pltpu


# Cap on channels unrolled per grid step (keeps the trace small; the running
# sum lives in the VMEM accumulator anyway, so chunking is nearly free).
_MAX_CC = 32
# Cap on elements of a block-sized f32 temporary (~24 vregs) so that
# tmp + one channel slab stay inside the 64-vreg file (no spill storm).
_MAX_BLOCK_ELEMS = 24 * 1024


def _eca_two_kernel(w_ref, x_ref, o_ref, acc_ref, *, cc, k_size, width, hw_pad):
    """One (batch tile, channel chunk) grid step.

    w_ref  : SMEM (C*k*k,) float32       flattened conv weight (scalar reads)
    x_ref  : VMEM (bt, cc*hw_pad)        lane-dense input slab (channels flat in lanes)
    o_ref  : VMEM (bt, hw_pad)           lane-dense output slab (written on last chunk)
    acc_ref: VMEM (bt, hw_pad) float32   accumulator scratch (persists across chunks)
    """
    kk = k_size * k_size
    chunk = pl.program_id(1)
    c_base = chunk * cc

    @pl.when(chunk == 0)
    def _():
        acc_ref[...] = jnp.zeros_like(acc_ref)

    for di in range(k_size):
        for dj in range(k_size):
            tap = di * k_size + dj
            # Channel reduction as scalar(SMEM) x vector FMAs on the VPU.
            # Channel slabs are re-read from VMEM every tap: vld slots have
            # slack while the VALU is the binding unit.
            tmp = None
            for c in range(cc):
                chan = x_ref[:, pl.ds(c * hw_pad, hw_pad)].astype(jnp.float32)
                t = w_ref[(c_base + c) * kk + tap] * chan
                tmp = t if tmp is None else tmp + t
            off = di * width + dj
            if off:
                # Left-rotate by `off`: position p then accumulates
                # w[c,di,dj] * x[c, p+off], i.e. the (i+di, j+dj) tap of output
                # pixel (i, j).  Wrapped lanes only land in positions with
                # i >= Ho or j >= Wo (stride=1, VALID conv), which the wrapper
                # crops away.
                tmp = pltpu.roll(tmp, hw_pad - off, 1)
            acc_ref[...] = acc_ref[...] + tmp

    @pl.when(chunk == pl.num_programs(1) - 1)
    def _():
        a = acc_ref[...]
        # Exact GELU (matches torch.nn.GELU default): 0.5*x*(1 + erf(x/sqrt(2)))
        y = 0.5 * a * (1.0 + lax.erf(a * (1.0 / math.sqrt(2.0))))
        o_ref[...] = y.astype(o_ref.dtype)


def _vmem_budget():
    """Generation-aware VMEM limit / tiling budget."""
    phys = 64 * 1024 * 1024  # conservative fallback (v7x per-core VMEM)
    try:
        cap = getattr(pltpu.get_tpu_info(), "vmem_capacity_bytes", None)
        if cap:
            phys = int(cap)
    except Exception:
        pass
    # ~88 MiB on 128 MiB parts (v5e/v6e), ~44 MiB on 64 MiB parts (v7x);
    # leaves headroom for Mosaic internal scratch and spills.
    vmem_limit = min(96 * 1024 * 1024, phys * 11 // 16)
    budget = vmem_limit * 3 // 4
    return vmem_limit, budget


def _pick_tiles(b, c, hw_pad, in_itemsize, out_itemsize, budget):
    """Pick (batch tile, channel chunk).  cc divides c; bt is bounded by the
    VMEM budget and by a vreg-pressure cap, and kept so there are >= 2 batch
    grid steps whenever b > 1 (both v7x TensorCores get work)."""

    def per_row(cc_):
        return (2 * cc_ * hw_pad * in_itemsize     # double-buffered input block
                + 2 * hw_pad * out_itemsize        # double-buffered output block
                + hw_pad * 4)                      # f32 accumulator scratch

    cc = 1
    for d in range(min(c, _MAX_CC), 0, -1):
        if c % d == 0 and per_row(d) <= budget:
            cc = d
            break

    bt = max(1, min(b, budget // per_row(cc)))
    bt = min(bt, max(1, _MAX_BLOCK_ELEMS // hw_pad))   # vreg-pressure cap
    if b > 1:
        bt = min(bt, -(-b // 2))                       # >= 2 batch grid steps
    return bt, cc


def eca_layer_two_forward(x, weight, k_size):
    """x: (B, C, H, W), weight: (1, C, k, k) -> (B, 1, Ho, Wo).  Stride 1, VALID."""
    b, c, h, w = x.shape
    assert weight.shape == (1, c, k_size, k_size), weight.shape
    h_out = h - k_size + 1
    w_out = w - k_size + 1
    hw = h * w
    hw_pad = -(-hw // 128) * 128          # lane-dense flattened spatial axis

    # Lane-dense layout: (B, C, HW) [pad HW to 128-multiple if needed], then
    # flatten channels into the lane axis with a singleton middle dim so the
    # (8,128) rule applies to (1, lanes) and bt is unconstrained.
    x_flat = x.reshape(b, c, hw)
    if hw_pad != hw:
        x_flat = jnp.pad(x_flat, ((0, 0), (0, 0), (0, hw_pad - hw)))
    x_flat = x_flat.reshape(b, 1, c * hw_pad)

    w_flat = weight.reshape(c * k_size * k_size).astype(jnp.float32)

    vmem_limit, budget = _vmem_budget()
    out_dtype = x.dtype
    bt, cc = _pick_tiles(b, c, hw_pad, x.dtype.itemsize,
                         jnp.dtype(out_dtype).itemsize, budget)
    grid = (pl.cdiv(b, bt), c // cc)

    kernel = functools.partial(_eca_two_kernel, cc=cc, k_size=k_size,
                               width=w, hw_pad=hw_pad)

    cost = pl.CostEstimate(
        flops=int(2 * b * c * k_size * k_size * h_out * w_out + 8 * b * hw),
        transcendentals=int(b * hw),
        bytes_accessed=int((b * c * hw + b * hw) * x.dtype.itemsize
                           + c * k_size * k_size * 4),
    )

    out_flat = pl.pallas_call(
        kernel,
        out_shape=jax.ShapeDtypeStruct((b, 1, hw_pad), out_dtype),
        grid_spec=pltpu.PrefetchScalarGridSpec(
            num_scalar_prefetch=0,
            grid=grid,
            in_specs=[
                # Flat weights live in SMEM; read as scalars in the kernel.
                pl.BlockSpec(memory_space=pltpu.MemorySpace.SMEM),
                # Batch tile x channel chunk of the lane-dense input slab.
                pl.BlockSpec((bt, None, cc * hw_pad), lambda i, j: (i, 0, j)),
            ],
            # Output block independent of the channel-chunk axis (resident
            # across it); written only on the last chunk.
            out_specs=pl.BlockSpec((bt, None, hw_pad), lambda i, j: (i, 0, 0)),
            scratch_shapes=[pltpu.VMEM((bt, hw_pad), jnp.float32)],
        ),
        compiler_params=pltpu.CompilerParams(
            dimension_semantics=("parallel", "arbitrary"),
            vmem_limit_bytes=int(vmem_limit),
        ),
        cost_estimate=cost,
    )(w_flat, x_flat)

    # Crop the flat padded (hw_pad) conv result to the valid (Ho, Wo) window.
    y = out_flat[:, :, :hw].reshape(b, 1, h, w)
    return y[:, :, :h_out, :w_out]


def _reference(x, weight):
    # Pure-JAX reference for sanity checking.
    y = lax.conv_general_dilated(
        x, weight, window_strides=(1, 1), padding="VALID",
        dimension_numbers=("NCHW", "OIHW", "NCHW"),
    )
    return 0.5 * y * (1.0 + lax.erf(y / math.sqrt(2.0)))


if __name__ == "__main__":
    key = jax.random.PRNGKey(0)
    kx, kw = jax.random.split(key)

    B, C, H, W = 2, 4, 16, 16
    K = 3

    x = jax.random.normal(kx, (B, C, H, W), dtype=jnp.float32)
    # Deterministic Conv2d-like weight init, shape (1, C, K, K)
    fan_in = C * K * K
    bound = 1.0 / math.sqrt(fan_in)
    weight = jax.random.uniform(
        kw, (1, C, K, K), dtype=jnp.float32, minval=-bound, maxval=bound
    )

    out = eca_layer_two_forward(x, weight, K)
    out = jax.block_until_ready(out)

    ref = _reference(x, weight)
    assert out.shape == (B, 1, H - K + 1, W - K + 1), out.shape
    err = float(jnp.max(jnp.abs(out - ref)))
    assert jnp.allclose(out, ref, atol=1e-5, rtol=1e-5), err
    print("KERNEL_OK")
</pallas_src>

<mosaic_0001>
module attributes {stable_mosaic.version = 11 : i64} {
  func.func @_eca_two_kernel(%arg0: i32, %arg1: i32, %arg2: memref<36xf32, #tpu.memory_space<smem>>, %arg3: memref<1x1x1024xf32, #tpu.memory_space<vmem>>, %arg4: memref<1x1x256xf32, #tpu.memory_space<vmem>>, %arg5: memref<1x256xf32, #tpu.memory_space<vmem>>) attributes {dimension_semantics = [#tpu.dimension_semantics<parallel>, #tpu.dimension_semantics<arbitrary>], iteration_bounds = array<i64: 2, 1>, scalar_prefetch = 0 : i64, scratch_operands = 1 : i64, tpu.core_type = #tpu.core_type<tc>, window_params = [{transform_indices = @transform_0, window_bounds = array<i64: 36>}, {transform_indices = @transform_1, window_bounds = array<i64: 1, 1, 1024>}, {transform_indices = @transform_2, window_bounds = array<i64: 1, 1, 256>}]} {
    %c4_i32 = arith.constant 4 : i32
    %0 = arith.muli %arg1, %c4_i32 : i32
    %c0_i32 = arith.constant 0 : i32
    %1 = arith.cmpi eq, %arg1, %c0_i32 : i32
    %2 = arith.extui %1 : i1 to i32
    %c0_i32_0 = arith.constant 0 : i32
    %3 = arith.cmpi ne, %2, %c0_i32_0 : i32
    scf.if %3 {
      %cst = arith.constant 0.000000e+00 : f32
      %393 = vector.broadcast %cst : f32 to vector<1x256xf32>
      %c0_243 = arith.constant 0 : index
      %c0_244 = arith.constant 0 : index
      %394 = vector.load %arg5[%c0_243, %c0_244] : memref<1x256xf32, #tpu.memory_space<vmem>>, vector<1x256xf32>
      tpu.vector_store %arg5[%c0_243, %c0_244], %393 {strides = array<i32>} : memref<1x256xf32, #tpu.memory_space<vmem>>, vector<1x256xf32>,
    } else {
    }
    %c0 = arith.constant 0 : index
    %c0_1 = arith.constant 0 : index
    %c0_2 = arith.constant 0 : index
    %4 = vector.load %arg3[%c0, %c0_1, %c0_2] : memref<1x1x1024xf32, #tpu.memory_space<vmem>>, vector<1x1x256xf32>
    %5 = vector.shape_cast %4 : vector<1x1x256xf32> to vector<1x256xf32>
    %c0_i32_3 = arith.constant 0 : i32
    %6 = arith.addi %0, %c0_i32_3 : i32
    %c9_i32 = arith.constant 9 : i32
    %7 = arith.muli %6, %c9_i32 : i32
    %c0_i32_4 = arith.constant 0 : i32
    %8 = arith.addi %7, %c0_i32_4 : i32
    %9 = arith.index_cast %8 : i32 to index
    %10 = memref.load %arg2[%9] : memref<36xf32, #tpu.memory_space<smem>>
    %11 = vector.broadcast %10 : f32 to vector<1x256xf32>
    %12 = arith.mulf %11, %5 : vector<1x256xf32>
    %c0_5 = arith.constant 0 : index
    %c0_6 = arith.constant 0 : index
    %c256 = arith.constant 256 : index
    %13 = vector.load %arg3[%c0_5, %c0_6, %c256] : memref<1x1x1024xf32, #tpu.memory_space<vmem>>, vector<1x1x256xf32>
    %14 = vector.shape_cast %13 : vector<1x1x256xf32> to vector<1x256xf32>
    %c1_i32 = arith.constant 1 : i32
    %15 = arith.addi %0, %c1_i32 : i32
    %c9_i32_7 = arith.constant 9 : i32
    %16 = arith.muli %15, %c9_i32_7 : i32
    %c0_i32_8 = arith.constant 0 : i32
    %17 = arith.addi %16, %c0_i32_8 : i32
    %18 = arith.index_cast %17 : i32 to index
    %19 = memref.load %arg2[%18] : memref<36xf32, #tpu.memory_space<smem>>
    %20 = vector.broadcast %19 : f32 to vector<1x256xf32>
    %21 = arith.mulf %20, %14 : vector<1x256xf32>
    %22 = arith.addf %12, %21 : vector<1x256xf32>
    %c0_9 = arith.constant 0 : index
    %c0_10 = arith.constant 0 : index
    %c512 = arith.constant 512 : index
    %23 = vector.load %arg3[%c0_9, %c0_10, %c512] : memref<1x1x1024xf32, #tpu.memory_space<vmem>>, vector<1x1x256xf32>
    %24 = vector.shape_cast %23 : vector<1x1x256xf32> to vector<1x256xf32>
    %c2_i32 = arith.constant 2 : i32
    %25 = arith.addi %0, %c2_i32 : i32
    %c9_i32_11 = arith.constant 9 : i32
    %26 = arith.muli %25, %c9_i32_11 : i32
    %c0_i32_12 = arith.constant 0 : i32
    %27 = arith.addi %26, %c0_i32_12 : i32
    %28 = arith.index_cast %27 : i32 to index
    %29 = memref.load %arg2[%28] : memref<36xf32, #tpu.memory_space<smem>>
    %30 = vector.broadcast %29 : f32 to vector<1x256xf32>
    %31 = arith.mulf %30, %24 : vector<1x256xf32>
    %32 = arith.addf %22, %31 : vector<1x256xf32>
    %c0_13 = arith.constant 0 : index
    %c0_14 = arith.constant 0 : index
    %c768 = arith.constant 768 : index
    %33 = vector.load %arg3[%c0_13, %c0_14, %c768] : memref<1x1x1024xf32, #tpu.memory_space<vmem>>, vector<1x1x256xf32>
    %34 = vector.shape_cast %33 : vector<1x1x256xf32> to vector<1x256xf32>
    %c3_i32 = arith.constant 3 : i32
    %35 = arith.addi %0, %c3_i32 : i32
    %c9_i32_15 = arith.constant 9 : i32
    %36 = arith.muli %35, %c9_i32_15 : i32
    %c0_i32_16 = arith.constant 0 : i32
    %37 = arith.addi %36, %c0_i32_16 : i32
    %38 = arith.index_cast %37 : i32 to index
    %39 = memref.load %arg2[%38] : memref<36xf32, #tpu.memory_space<smem>>
    %40 = vector.broadcast %39 : f32 to vector<1x256xf32>
    %41 = arith.mulf %40, %34 : vector<1x256xf32>
    %42 = arith.addf %32, %41 : vector<1x256xf32>
    %c0_17 = arith.constant 0 : index
    %c0_18 = arith.constant 0 : index
    %43 = vector.load %arg5[%c0_17, %c0_18] : memref<1x256xf32, #tpu.memory_space<vmem>>, vector<1x256xf32>
    %44 = arith.addf %43, %42 : vector<1x256xf32>
    %c0_19 = arith.constant 0 : index
    %c0_20 = arith.constant 0 : index
    %45 = vector.load %arg5[%c0_19, %c0_20] : memref<1x256xf32, #tpu.memory_space<vmem>>, vector<1x256xf32>
    tpu.vector_store %arg5[%c0_19, %c0_20], %44 {strides = array<i32>} : memref<1x256xf32, #tpu.memory_space<vmem>>, vector<1x256xf32>,
    %c0_21 = arith.constant 0 : index
    %c0_22 = arith.constant 0 : index
    %c0_23 = arith.constant 0 : index
    %46 = vector.load %arg3[%c0_21, %c0_22, %c0_23] : memref<1x1x1024xf32, #tpu.memory_space<vmem>>, vector<1x1x256xf32>
    %47 = vector.shape_cast %46 : vector<1x1x256xf32> to vector<1x256xf32>
    %c0_i32_24 = arith.constant 0 : i32
    %48 = arith.addi %0, %c0_i32_24 : i32
    %c9_i32_25 = arith.constant 9 : i32
    %49 = arith.muli %48, %c9_i32_25 : i32
    %c1_i32_26 = arith.constant 1 : i32
    %50 = arith.addi %49, %c1_i32_26 : i32
    %51 = arith.index_cast %50 : i32 to index
    %52 = memref.load %arg2[%51] : memref<36xf32, #tpu.memory_space<smem>>
    %53 = vector.broadcast %52 : f32 to vector<1x256xf32>
    %54 = arith.mulf %53, %47 : vector<1x256xf32>
    %c0_27 = arith.constant 0 : index
    %c0_28 = arith.constant 0 : index
    %c256_29 = arith.constant 256 : index
    %55 = vector.load %arg3[%c0_27, %c0_28, %c256_29] : memref<1x1x1024xf32, #tpu.memory_space<vmem>>, vector<1x1x256xf32>
    %56 = vector.shape_cast %55 : vector<1x1x256xf32> to vector<1x256xf32>
    %c1_i32_30 = arith.constant 1 : i32
    %57 = arith.addi %0, %c1_i32_30 : i32
    %c9_i32_31 = arith.constant 9 : i32
    %58 = arith.muli %57, %c9_i32_31 : i32
    %c1_i32_32 = arith.constant 1 : i32
    %59 = arith.addi %58, %c1_i32_32 : i32
    %60 = arith.index_cast %59 : i32 to index
    %61 = memref.load %arg2[%60] : memref<36xf32, #tpu.memory_space<smem>>
    %62 = vector.broadcast %61 : f32 to vector<1x256xf32>
    %63 = arith.mulf %62, %56 : vector<1x256xf32>
    %64 = arith.addf %54, %63 : vector<1x256xf32>
    %c0_33 = arith.constant 0 : index
    %c0_34 = arith.constant 0 : index
    %c512_35 = arith.constant 512 : index
    %65 = vector.load %arg3[%c0_33, %c0_34, %c512_35] : memref<1x1x1024xf32, #tpu.memory_space<vmem>>, vector<1x1x256xf32>
    %66 = vector.shape_cast %65 : vector<1x1x256xf32> to vector<1x256xf32>
    %c2_i32_36 = arith.constant 2 : i32
    %67 = arith.addi %0, %c2_i32_36 : i32
    %c9_i32_37 = arith.constant 9 : i32
    %68 = arith.muli %67, %c9_i32_37 : i32
    %c1_i32_38 = arith.constant 1 : i32
    %69 = arith.addi %68, %c1_i32_38 : i32
    %70 = arith.index_cast %69 : i32 to index
    %71 = memref.load %arg2[%70] : memref<36xf32, #tpu.memory_space<smem>>
    %72 = vector.broadcast %71 : f32 to vector<1x256xf32>
    %73 = arith.mulf %72, %66 : vector<1x256xf32>
    %74 = arith.addf %64, %73 : vector<1x256xf32>
    %c0_39 = arith.constant 0 : index
    %c0_40 = arith.constant 0 : index
    %c768_41 = arith.constant 768 : index
    %75 = vector.load %arg3[%c0_39, %c0_40, %c768_41] : memref<1x1x1024xf32, #tpu.memory_space<vmem>>, vector<1x1x256xf32>
    %76 = vector.shape_cast %75 : vector<1x1x256xf32> to vector<1x256xf32>
    %c3_i32_42 = arith.constant 3 : i32
    %77 = arith.addi %0, %c3_i32_42 : i32
    %c9_i32_43 = arith.constant 9 : i32
    %78 = arith.muli %77, %c9_i32_43 : i32
    %c1_i32_44 = arith.constant 1 : i32
    %79 = arith.addi %78, %c1_i32_44 : i32
    %80 = arith.index_cast %79 : i32 to index
    %81 = memref.load %arg2[%80] : memref<36xf32, #tpu.memory_space<smem>>
    %82 = vector.broadcast %81 : f32 to vector<1x256xf32>
    %83 = arith.mulf %82, %76 : vector<1x256xf32>
    %84 = arith.addf %74, %83 : vector<1x256xf32>
    %c255_i32 = arith.constant 255 : i32
    %85 = tpu.dynamic_rotate %84 by %c255_i32 dim 1 : vector<1x256xf32>, i32 -> vector<1x256xf32>
    %c0_45 = arith.constant 0 : index
    %c0_46 = arith.constant 0 : index
    %86 = vector.load %arg5[%c0_45, %c0_46] : memref<1x256xf32, #tpu.memory_space<vmem>>, vector<1x256xf32>
    %87 = arith.addf %86, %85 : vector<1x256xf32>
    %c0_47 = arith.constant 0 : index
    %c0_48 = arith.constant 0 : index
    %88 = vector.load %arg5[%c0_47, %c0_48] : memref<1x256xf32, #tpu.memory_space<vmem>>, vector<1x256xf32>
    tpu.vector_store %arg5[%c0_47, %c0_48], %87 {strides = array<i32>} : memref<1x256xf32, #tpu.memory_space<vmem>>, vector<1x256xf32>,
    %c0_49 = arith.constant 0 : index
    %c0_50 = arith.constant 0 : index
    %c0_51 = arith.constant 0 : index
    %89 = vector.load %arg3[%c0_49, %c0_50, %c0_51] : memref<1x1x1024xf32, #tpu.memory_space<vmem>>, vector<1x1x256xf32>
    %90 = vector.shape_cast %89 : vector<1x1x256xf32> to vector<1x256xf32>
    %c0_i32_52 = arith.constant 0 : i32
    %91 = arith.addi %0, %c0_i32_52 : i32
    %c9_i32_53 = arith.constant 9 : i32
    %92 = arith.muli %91, %c9_i32_53 : i32
    %c2_i32_54 = arith.constant 2 : i32
    %93 = arith.addi %92, %c2_i32_54 : i32
    %94 = arith.index_cast %93 : i32 to index
    %95 = memref.load %arg2[%94] : memref<36xf32, #tpu.memory_space<smem>>
    %96 = vector.broadcast %95 : f32 to vector<1x256xf32>
    %97 = arith.mulf %96, %90 : vector<1x256xf32>
    %c0_55 = arith.constant 0 : index
    %c0_56 = arith.constant 0 : index
    %c256_57 = arith.constant 256 : index
    %98 = vector.load %arg3[%c0_55, %c0_56, %c256_57] : memref<1x1x1024xf32, #tpu.memory_space<vmem>>, vector<1x1x256xf32>
    %99 = vector.shape_cast %98 : vector<1x1x256xf32> to vector<1x256xf32>
    %c1_i32_58 = arith.constant 1 : i32
    %100 = arith.addi %0, %c1_i32_58 : i32
    %c9_i32_59 = arith.constant 9 : i32
    %101 = arith.muli %100, %c9_i32_59 : i32
    %c2_i32_60 = arith.constant 2 : i32
    %102 = arith.addi %101, %c2_i32_60 : i32
    %103 = arith.index_cast %102 : i32 to index
    %104 = memref.load %arg2[%103] : memref<36xf32, #tpu.memory_space<smem>>
    %105 = vector.broadcast %104 : f32 to vector<1x256xf32>
    %106 = arith.mulf %105, %99 : vector<1x256xf32>
    %107 = arith.addf %97, %106 : vector<1x256xf32>
    %c0_61 = arith.constant 0 : index
    %c0_62 = arith.constant 0 : index
    %c512_63 = arith.constant 512 : index
    %108 = vector.load %arg3[%c0_61, %c0_62, %c512_63] : memref<1x1x1024xf32, #tpu.memory_space<vmem>>, vector<1x1x256xf32>
    %109 = vector.shape_cast %108 : vector<1x1x256xf32> to vector<1x256xf32>
    %c2_i32_64 = arith.constant 2 : i32
    %110 = arith.addi %0, %c2_i32_64 : i32
    %c9_i32_65 = arith.constant 9 : i32
    %111 = arith.muli %110, %c9_i32_65 : i32
    %c2_i32_66 = arith.constant 2 : i32
    %112 = arith.addi %111, %c2_i32_66 : i32
    %113 = arith.index_cast %112 : i32 to index
    %114 = memref.load %arg2[%113] : memref<36xf32, #tpu.memory_space<smem>>
    %115 = vector.broadcast %114 : f32 to vector<1x256xf32>
    %116 = arith.mulf %115, %109 : vector<1x256xf32>
    %117 = arith.addf %107, %116 : vector<1x256xf32>
    %c0_67 = arith.constant 0 : index
    %c0_68 = arith.constant 0 : index
    %c768_69 = arith.constant 768 : index
    %118 = vector.load %arg3[%c0_67, %c0_68, %c768_69] : memref<1x1x1024xf32, #tpu.memory_space<vmem>>, vector<1x1x256xf32>
    %119 = vector.shape_cast %118 : vector<1x1x256xf32> to vector<1x256xf32>
    %c3_i32_70 = arith.constant 3 : i32
    %120 = arith.addi %0, %c3_i32_70 : i32
    %c9_i32_71 = arith.constant 9 : i32
    %121 = arith.muli %120, %c9_i32_71 : i32
    %c2_i32_72 = arith.constant 2 : i32
    %122 = arith.addi %121, %c2_i32_72 : i32
    %123 = arith.index_cast %122 : i32 to index
    %124 = memref.load %arg2[%123] : memref<36xf32, #tpu.memory_space<smem>>
    %125 = vector.broadcast %124 : f32 to vector<1x256xf32>
    %126 = arith.mulf %125, %119 : vector<1x256xf32>
    %127 = arith.addf %117, %126 : vector<1x256xf32>
    %c254_i32 = arith.constant 254 : i32
    %128 = tpu.dynamic_rotate %127 by %c254_i32 dim 1 : vector<1x256xf32>, i32 -> vector<1x256xf32>
    %c0_73 = arith.constant 0 : index
    %c0_74 = arith.constant 0 : index
    %129 = vector.load %arg5[%c0_73, %c0_74] : memref<1x256xf32, #tpu.memory_space<vmem>>, vector<1x256xf32>
    %130 = arith.addf %129, %128 : vector<1x256xf32>
    %c0_75 = arith.constant 0 : index
    %c0_76 = arith.constant 0 : index
    %131 = vector.load %arg5[%c0_75, %c0_76] : memref<1x256xf32, #tpu.memory_space<vmem>>, vector<1x256xf32>
    tpu.vector_store %arg5[%c0_75, %c0_76], %130 {strides = array<i32>} : memref<1x256xf32, #tpu.memory_space<vmem>>, vector<1x256xf32>,
    %c0_77 = arith.constant 0 : index
    %c0_78 = arith.constant 0 : index
    %c0_79 = arith.constant 0 : index
    %132 = vector.load %arg3[%c0_77, %c0_78, %c0_79] : memref<1x1x1024xf32, #tpu.memory_space<vmem>>, vector<1x1x256xf32>
    %133 = vector.shape_cast %132 : vector<1x1x256xf32> to vector<1x256xf32>
    %c0_i32_80 = arith.constant 0 : i32
    %134 = arith.addi %0, %c0_i32_80 : i32
    %c9_i32_81 = arith.constant 9 : i32
    %135 = arith.muli %134, %c9_i32_81 : i32
    %c3_i32_82 = arith.constant 3 : i32
    %136 = arith.addi %135, %c3_i32_82 : i32
    %137 = arith.index_cast %136 : i32 to index
    %138 = memref.load %arg2[%137] : memref<36xf32, #tpu.memory_space<smem>>
    %139 = vector.broadcast %138 : f32 to vector<1x256xf32>
    %140 = arith.mulf %139, %133 : vector<1x256xf32>
    %c0_83 = arith.constant 0 : index
    %c0_84 = arith.constant 0 : index
    %c256_85 = arith.constant 256 : index
    %141 = vector.load %arg3[%c0_83, %c0_84, %c256_85] : memref<1x1x1024xf32, #tpu.memory_space<vmem>>, vector<1x1x256xf32>
    %142 = vector.shape_cast %141 : vector<1x1x256xf32> to vector<1x256xf32>
    %c1_i32_86 = arith.constant 1 : i32
    %143 = arith.addi %0, %c1_i32_86 : i32
    %c9_i32_87 = arith.constant 9 : i32
    %144 = arith.muli %143, %c9_i32_87 : i32
    %c3_i32_88 = arith.constant 3 : i32
    %145 = arith.addi %144, %c3_i32_88 : i32
    %146 = arith.index_cast %145 : i32 to index
    %147 = memref.load %arg2[%146] : memref<36xf32, #tpu.memory_space<smem>>
    %148 = vector.broadcast %147 : f32 to vector<1x256xf32>
    %149 = arith.mulf %148, %142 : vector<1x256xf32>
    %150 = arith.addf %140, %149 : vector<1x256xf32>
    %c0_89 = arith.constant 0 : index
    %c0_90 = arith.constant 0 : index
    %c512_91 = arith.constant 512 : index
    %151 = vector.load %arg3[%c0_89, %c0_90, %c512_91] : memref<1x1x1024xf32, #tpu.memory_space<vmem>>, vector<1x1x256xf32>
    %152 = vector.shape_cast %151 : vector<1x1x256xf32> to vector<1x256xf32>
    %c2_i32_92 = arith.constant 2 : i32
    %153 = arith.addi %0, %c2_i32_92 : i32
    %c9_i32_93 = arith.constant 9 : i32
    %154 = arith.muli %153, %c9_i32_93 : i32
    %c3_i32_94 = arith.constant 3 : i32
    %155 = arith.addi %154, %c3_i32_94 : i32
    %156 = arith.index_cast %155 : i32 to index
    %157 = memref.load %arg2[%156] : memref<36xf32, #tpu.memory_space<smem>>
    %158 = vector.broadcast %157 : f32 to vector<1x256xf32>
    %159 = arith.mulf %158, %152 : vector<1x256xf32>
    %160 = arith.addf %150, %159 : vector<1x256xf32>
    %c0_95 = arith.constant 0 : index
    %c0_96 = arith.constant 0 : index
    %c768_97 = arith.constant 768 : index
    %161 = vector.load %arg3[%c0_95, %c0_96, %c768_97] : memref<1x1x1024xf32, #tpu.memory_space<vmem>>, vector<1x1x256xf32>
    %162 = vector.shape_cast %161 : vector<1x1x256xf32> to vector<1x256xf32>
    %c3_i32_98 = arith.constant 3 : i32
    %163 = arith.addi %0, %c3_i32_98 : i32
    %c9_i32_99 = arith.constant 9 : i32
    %164 = arith.muli %163, %c9_i32_99 : i32
    %c3_i32_100 = arith.constant 3 : i32
    %165 = arith.addi %164, %c3_i32_100 : i32
    %166 = arith.index_cast %165 : i32 to index
    %167 = memref.load %arg2[%166] : memref<36xf32, #tpu.memory_space<smem>>
    %168 = vector.broadcast %167 : f32 to vector<1x256xf32>
    %169 = arith.mulf %168, %162 : vector<1x256xf32>
    %170 = arith.addf %160, %169 : vector<1x256xf32>
    %c240_i32 = arith.constant 240 : i32
    %171 = tpu.dynamic_rotate %170 by %c240_i32 dim 1 : vector<1x256xf32>, i32 -> vector<1x256xf32>
    %c0_101 = arith.constant 0 : index
    %c0_102 = arith.constant 0 : index
    %172 = vector.load %arg5[%c0_101, %c0_102] : memref<1x256xf32, #tpu.memory_space<vmem>>, vector<1x256xf32>
    %173 = arith.addf %172, %171 : vector<1x256xf32>
    %c0_103 = arith.constant 0 : index
    %c0_104 = arith.constant 0 : index
    %174 = vector.load %arg5[%c0_103, %c0_104] : memref<1x256xf32, #tpu.memory_space<vmem>>, vector<1x256xf32>
    tpu.vector_store %arg5[%c0_103, %c0_104], %173 {strides = array<i32>} : memref<1x256xf32, #tpu.memory_space<vmem>>, vector<1x256xf32>,
    %c0_105 = arith.constant 0 : index
    %c0_106 = arith.constant 0 : index
    %c0_107 = arith.constant 0 : index
    %175 = vector.load %arg3[%c0_105, %c0_106, %c0_107] : memref<1x1x1024xf32, #tpu.memory_space<vmem>>, vector<1x1x256xf32>
    %176 = vector.shape_cast %175 : vector<1x1x256xf32> to vector<1x256xf32>
    %c0_i32_108 = arith.constant 0 : i32
    %177 = arith.addi %0, %c0_i32_108 : i32
    %c9_i32_109 = arith.constant 9 : i32
    %178 = arith.muli %177, %c9_i32_109 : i32
    %c4_i32_110 = arith.constant 4 : i32
    %179 = arith.addi %178, %c4_i32_110 : i32
    %180 = arith.index_cast %179 : i32 to index
    %181 = memref.load %arg2[%180] : memref<36xf32, #tpu.memory_space<smem>>
    %182 = vector.broadcast %181 : f32 to vector<1x256xf32>
    %183 = arith.mulf %182, %176 : vector<1x256xf32>
    %c0_111 = arith.constant 0 : index
    %c0_112 = arith.constant 0 : index
    %c256_113 = arith.constant 256 : index
    %184 = vector.load %arg3[%c0_111, %c0_112, %c256_113] : memref<1x1x1024xf32, #tpu.memory_space<vmem>>, vector<1x1x256xf32>
    %185 = vector.shape_cast %184 : vector<1x1x256xf32> to vector<1x256xf32>
    %c1_i32_114 = arith.constant 1 : i32
    %186 = arith.addi %0, %c1_i32_114 : i32
    %c9_i32_115 = arith.constant 9 : i32
    %187 = arith.muli %186, %c9_i32_115 : i32
    %c4_i32_116 = arith.constant 4 : i32
    %188 = arith.addi %187, %c4_i32_116 : i32
    %189 = arith.index_cast %188 : i32 to index
    %190 = memref.load %arg2[%189] : memref<36xf32, #tpu.memory_space<smem>>
    %191 = vector.broadcast %190 : f32 to vector<1x256xf32>
    %192 = arith.mulf %191, %185 : vector<1x256xf32>
    %193 = arith.addf %183, %192 : vector<1x256xf32>
    %c0_117 = arith.constant 0 : index
    %c0_118 = arith.constant 0 : index
    %c512_119 = arith.constant 512 : index
    %194 = vector.load %arg3[%c0_117, %c0_118, %c512_119] : memref<1x1x1024xf32, #tpu.memory_space<vmem>>, vector<1x1x256xf32>
    %195 = vector.shape_cast %194 : vector<1x1x256xf32> to vector<1x256xf32>
    %c2_i32_120 = arith.constant 2 : i32
    %196 = arith.addi %0, %c2_i32_120 : i32
    %c9_i32_121 = arith.constant 9 : i32
    %197 = arith.muli %196, %c9_i32_121 : i32
    %c4_i32_122 = arith.constant 4 : i32
    %198 = arith.addi %197, %c4_i32_122 : i32
    %199 = arith.index_cast %198 : i32 to index
    %200 = memref.load %arg2[%199] : memref<36xf32, #tpu.memory_space<smem>>
    %201 = vector.broadcast %200 : f32 to vector<1x256xf32>
    %202 = arith.mulf %201, %195 : vector<1x256xf32>
    %203 = arith.addf %193, %202 : vector<1x256xf32>
    %c0_123 = arith.constant 0 : index
    %c0_124 = arith.constant 0 : index
    %c768_125 = arith.constant 768 : index
    %204 = vector.load %arg3[%c0_123, %c0_124, %c768_125] : memref<1x1x1024xf32, #tpu.memory_space<vmem>>, vector<1x1x256xf32>
    %205 = vector.shape_cast %204 : vector<1x1x256xf32> to vector<1x256xf32>
    %c3_i32_126 = arith.constant 3 : i32
    %206 = arith.addi %0, %c3_i32_126 : i32
    %c9_i32_127 = arith.constant 9 : i32
    %207 = arith.muli %206, %c9_i32_127 : i32
    %c4_i32_128 = arith.constant 4 : i32
    %208 = arith.addi %207, %c4_i32_128 : i32
    %209 = arith.index_cast %208 : i32 to index
    %210 = memref.load %arg2[%209] : memref<36xf32, #tpu.memory_space<smem>>
    %211 = vector.broadcast %210 : f32 to vector<1x256xf32>
    %212 = arith.mulf %211, %205 : vector<1x256xf32>
    %213 = arith.addf %203, %212 : vector<1x256xf32>
    %c239_i32 = arith.constant 239 : i32
    %214 = tpu.dynamic_rotate %213 by %c239_i32 dim 1 : vector<1x256xf32>, i32 -> vector<1x256xf32>
    %c0_129 = arith.constant 0 : index
    %c0_130 = arith.constant 0 : index
    %215 = vector.load %arg5[%c0_129, %c0_130] : memref<1x256xf32, #tpu.memory_space<vmem>>, vector<1x256xf32>
    %216 = arith.addf %215, %214 : vector<1x256xf32>
    %c0_131 = arith.constant 0 : index
    %c0_132 = arith.constant 0 : index
    %217 = vector.load %arg5[%c0_131, %c0_132] : memref<1x256xf32, #tpu.memory_space<vmem>>, vector<1x256xf32>
    tpu.vector_store %arg5[%c0_131, %c0_132], %216 {strides = array<i32>} : memref<1x256xf32, #tpu.memory_space<vmem>>, vector<1x256xf32>,
    %c0_133 = arith.constant 0 : index
    %c0_134 = arith.constant 0 : index
    %c0_135 = arith.constant 0 : index
    %218 = vector.load %arg3[%c0_133, %c0_134, %c0_135] : memref<1x1x1024xf32, #tpu.memory_space<vmem>>, vector<1x1x256xf32>
    %219 = vector.shape_cast %218 : vector<1x1x256xf32> to vector<1x256xf32>
    %c0_i32_136 = arith.constant 0 : i32
    %220 = arith.addi %0, %c0_i32_136 : i32
    %c9_i32_137 = arith.constant 9 : i32
    %221 = arith.muli %220, %c9_i32_137 : i32
    %c5_i32 = arith.constant 5 : i32
    %222 = arith.addi %221, %c5_i32 : i32
    %223 = arith.index_cast %222 : i32 to index
    %224 = memref.load %arg2[%223] : memref<36xf32, #tpu.memory_space<smem>>
    %225 = vector.broadcast %224 : f32 to vector<1x256xf32>
    %226 = arith.mulf %225, %219 : vector<1x256xf32>
    %c0_138 = arith.constant 0 : index
    %c0_139 = arith.constant 0 : index
    %c256_140 = arith.constant 256 : index
    %227 = vector.load %arg3[%c0_138, %c0_139, %c256_140] : memref<1x1x1024xf32, #tpu.memory_space<vmem>>, vector<1x1x256xf32>
    %228 = vector.shape_cast %227 : vector<1x1x256xf32> to vector<1x256xf32>
    %c1_i32_141 = arith.constant 1 : i32
    %229 = arith.addi %0, %c1_i32_141 : i32
    %c9_i32_142 = arith.constant 9 : i32
    %230 = arith.muli %229, %c9_i32_142 : i32
    %c5_i32_143 = arith.constant 5 : i32
    %231 = arith.addi %230, %c5_i32_143 : i32
    %232 = arith.index_cast %231 : i32 to index
    %233 = memref.load %arg2[%232] : memref<36xf32, #tpu.memory_space<smem>>
    %234 = vector.broadcast %233 : f32 to vector<1x256xf32>
    %235 = arith.mulf %234, %228 : vector<1x256xf32>
    %236 = arith.addf %226, %235 : vector<1x256xf32>
    %c0_144 = arith.constant 0 : index
    %c0_145 = arith.constant 0 : index
    %c512_146 = arith.constant 512 : index
    %237 = vector.load %arg3[%c0_144, %c0_145, %c512_146] : memref<1x1x1024xf32, #tpu.memory_space<vmem>>, vector<1x1x256xf32>
    %238 = vector.shape_cast %237 : vector<1x1x256xf32> to vector<1x256xf32>
    %c2_i32_147 = arith.constant 2 : i32
    %239 = arith.addi %0, %c2_i32_147 : i32
    %c9_i32_148 = arith.constant 9 : i32
    %240 = arith.muli %239, %c9_i32_148 : i32
    %c5_i32_149 = arith.constant 5 : i32
    %241 = arith.addi %240, %c5_i32_149 : i32
    %242 = arith.index_cast %241 : i32 to index
    %243 = memref.load %arg2[%242] : memref<36xf32, #tpu.memory_space<smem>>
    %244 = vector.broadcast %243 : f32 to vector<1x256xf32>
    %245 = arith.mulf %244, %238 : vector<1x256xf32>
    %246 = arith.addf %236, %245 : vector<1x256xf32>
    %c0_150 = arith.constant 0 : index
    %c0_151 = arith.constant 0 : index
    %c768_152 = arith.constant 768 : index
    %247 = vector.load %arg3[%c0_150, %c0_151, %c768_152] : memref<1x1x1024xf32, #tpu.memory_space<vmem>>, vector<1x1x256xf32>
    %248 = vector.shape_cast %247 : vector<1x1x256xf32> to vector<1x256xf32>
    %c3_i32_153 = arith.constant 3 : i32
    %249 = arith.addi %0, %c3_i32_153 : i32
    %c9_i32_154 = arith.constant 9 : i32
    %250 = arith.muli %249, %c9_i32_154 : i32
    %c5_i32_155 = arith.constant 5 : i32
    %251 = arith.addi %250, %c5_i32_155 : i32
    %252 = arith.index_cast %251 : i32 to index
    %253 = memref.load %arg2[%252] : memref<36xf32, #tpu.memory_space<smem>>
    %254 = vector.broadcast %253 : f32 to vector<1x256xf32>
    %255 = arith.mulf %254, %248 : vector<1x256xf32>
    %256 = arith.addf %246, %255 : vector<1x256xf32>
    %c238_i32 = arith.constant 238 : i32
    %257 = tpu.dynamic_rotate %256 by %c238_i32 dim 1 : vector<1x256xf32>, i32 -> vector<1x256xf32>
    %c0_156 = arith.constant 0 : index
    %c0_157 = arith.constant 0 : index
    %258 = vector.load %arg5[%c0_156, %c0_157] : memref<1x256xf32, #tpu.memory_space<vmem>>, vector<1x256xf32>
    %259 = arith.addf %258, %257 : vector<1x256xf32>
    %c0_158 = arith.constant 0 : index
    %c0_159 = arith.constant 0 : index
    %260 = vector.load %arg5[%c0_158, %c0_159] : memref<1x256xf32, #tpu.memory_space<vmem>>, vector<1x256xf32>
    tpu.vector_store %arg5[%c0_158, %c0_159], %259 {strides = array<i32>} : memref<1x256xf32, #tpu.memory_space<vmem>>, vector<1x256xf32>,
    %c0_160 = arith.constant 0 : index
    %c0_161 = arith.constant 0 : index
    %c0_162 = arith.constant 0 : index
    %261 = vector.load %arg3[%c0_160, %c0_161, %c0_162] : memref<1x1x1024xf32, #tpu.memory_space<vmem>>, vector<1x1x256xf32>
    %262 = vector.shape_cast %261 : vector<1x1x256xf32> to vector<1x256xf32>
    %c0_i32_163 = arith.constant 0 : i32
    %263 = arith.addi %0, %c0_i32_163 : i32
    %c9_i32_164 = arith.constant 9 : i32
    %264 = arith.muli %263, %c9_i32_164 : i32
    %c6_i32 = arith.constant 6 : i32
    %265 = arith.addi %264, %c6_i32 : i32
    %266 = arith.index_cast %265 : i32 to index
    %267 = memref.load %arg2[%266] : memref<36xf32, #tpu.memory_space<smem>>
    %268 = vector.broadcast %267 : f32 to vector<1x256xf32>
    %269 = arith.mulf %268, %262 : vector<1x256xf32>
    %c0_165 = arith.constant 0 : index
    %c0_166 = arith.constant 0 : index
    %c256_167 = arith.constant 256 : index
    %270 = vector.load %arg3[%c0_165, %c0_166, %c256_167] : memref<1x1x1024xf32, #tpu.memory_space<vmem>>, vector<1x1x256xf32>
    %271 = vector.shape_cast %270 : vector<1x1x256xf32> to vector<1x256xf32>
    %c1_i32_168 = arith.constant 1 : i32
    %272 = arith.addi %0, %c1_i32_168 : i32
    %c9_i32_169 = arith.constant 9 : i32
    %273 = arith.muli %272, %c9_i32_169 : i32
    %c6_i32_170 = arith.constant 6 : i32
    %274 = arith.addi %273, %c6_i32_170 : i32
    %275 = arith.index_cast %274 : i32 to index
    %276 = memref.load %arg2[%275] : memref<36xf32, #tpu.memory_space<smem>>
    %277 = vector.broadcast %276 : f32 to vector<1x256xf32>
    %278 = arith.mulf %277, %271 : vector<1x256xf32>
    %279 = arith.addf %269, %278 : vector<1x256xf32>
    %c0_171 = arith.constant 0 : index
    %c0_172 = arith.constant 0 : index
    %c512_173 = arith.constant 512 : index
    %280 = vector.load %arg3[%c0_171, %c0_172, %c512_173] : memref<1x1x1024xf32, #tpu.memory_space<vmem>>, vector<1x1x256xf32>
    %281 = vector.shape_cast %280 : vector<1x1x256xf32> to vector<1x256xf32>
    %c2_i32_174 = arith.constant 2 : i32
    %282 = arith.addi %0, %c2_i32_174 : i32
    %c9_i32_175 = arith.constant 9 : i32
    %283 = arith.muli %282, %c9_i32_175 : i32
    %c6_i32_176 = arith.constant 6 : i32
    %284 = arith.addi %283, %c6_i32_176 : i32
    %285 = arith.index_cast %284 : i32 to index
    %286 = memref.load %arg2[%285] : memref<36xf32, #tpu.memory_space<smem>>
    %287 = vector.broadcast %286 : f32 to vector<1x256xf32>
    %288 = arith.mulf %287, %281 : vector<1x256xf32>
    %289 = arith.addf %279, %288 : vector<1x256xf32>
    %c0_177 = arith.constant 0 : index
    %c0_178 = arith.constant 0 : index
    %c768_179 = arith.constant 768 : index
    %290 = vector.load %arg3[%c0_177, %c0_178, %c768_179] : memref<1x1x1024xf32, #tpu.memory_space<vmem>>, vector<1x1x256xf32>
    %291 = vector.shape_cast %290 : vector<1x1x256xf32> to vector<1x256xf32>
    %c3_i32_180 = arith.constant 3 : i32
    %292 = arith.addi %0, %c3_i32_180 : i32
    %c9_i32_181 = arith.constant 9 : i32
    %293 = arith.muli %292, %c9_i32_181 : i32
    %c6_i32_182 = arith.constant 6 : i32
    %294 = arith.addi %293, %c6_i32_182 : i32
    %295 = arith.index_cast %294 : i32 to index
    %296 = memref.load %arg2[%295] : memref<36xf32, #tpu.memory_space<smem>>
    %297 = vector.broadcast %296 : f32 to vector<1x256xf32>
    %298 = arith.mulf %297, %291 : vector<1x256xf32>
    %299 = arith.addf %289, %298 : vector<1x256xf32>
    %c224_i32 = arith.constant 224 : i32
    %300 = tpu.dynamic_rotate %299 by %c224_i32 dim 1 : vector<1x256xf32>, i32 -> vector<1x256xf32>
    %c0_183 = arith.constant 0 : index
    %c0_184 = arith.constant 0 : index
    %301 = vector.load %arg5[%c0_183, %c0_184] : memref<1x256xf32, #tpu.memory_space<vmem>>, vector<1x256xf32>
    %302 = arith.addf %301, %300 : vector<1x256xf32>
    %c0_185 = arith.constant 0 : index
    %c0_186 = arith.constant 0 : index
    %303 = vector.load %arg5[%c0_185, %c0_186] : memref<1x256xf32, #tpu.memory_space<vmem>>, vector<1x256xf32>
    tpu.vector_store %arg5[%c0_185, %c0_186], %302 {strides = array<i32>} : memref<1x256xf32, #tpu.memory_space<vmem>>, vector<1x256xf32>,
    %c0_187 = arith.constant 0 : index
    %c0_188 = arith.constant 0 : index
    %c0_189 = arith.constant 0 : index
    %304 = vector.load %arg3[%c0_187, %c0_188, %c0_189] : memref<1x1x1024xf32, #tpu.memory_space<vmem>>, vector<1x1x256xf32>
    %305 = vector.shape_cast %304 : vector<1x1x256xf32> to vector<1x256xf32>
    %c0_i32_190 = arith.constant 0 : i32
    %306 = arith.addi %0, %c0_i32_190 : i32
    %c9_i32_191 = arith.constant 9 : i32
    %307 = arith.muli %306, %c9_i32_191 : i32
    %c7_i32 = arith.constant 7 : i32
    %308 = arith.addi %307, %c7_i32 : i32
    %309 = arith.index_cast %308 : i32 to index
    %310 = memref.load %arg2[%309] : memref<36xf32, #tpu.memory_space<smem>>
    %311 = vector.broadcast %310 : f32 to vector<1x256xf32>
    %312 = arith.mulf %311, %305 : vector<1x256xf32>
    %c0_192 = arith.constant 0 : index
    %c0_193 = arith.constant 0 : index
    %c256_194 = arith.constant 256 : index
    %313 = vector.load %arg3[%c0_192, %c0_193, %c256_194] : memref<1x1x1024xf32, #tpu.memory_space<vmem>>, vector<1x1x256xf32>
    %314 = vector.shape_cast %313 : vector<1x1x256xf32> to vector<1x256xf32>
    %c1_i32_195 = arith.constant 1 : i32
    %315 = arith.addi %0, %c1_i32_195 : i32
    %c9_i32_196 = arith.constant 9 : i32
    %316 = arith.muli %315, %c9_i32_196 : i32
    %c7_i32_197 = arith.constant 7 : i32
    %317 = arith.addi %316, %c7_i32_197 : i32
    %318 = arith.index_cast %317 : i32 to index
    %319 = memref.load %arg2[%318] : memref<36xf32, #tpu.memory_space<smem>>
    %320 = vector.broadcast %319 : f32 to vector<1x256xf32>
    %321 = arith.mulf %320, %314 : vector<1x256xf32>
    %322 = arith.addf %312, %321 : vector<1x256xf32>
    %c0_198 = arith.constant 0 : index
    %c0_199 = arith.constant 0 : index
    %c512_200 = arith.constant 512 : index
    %323 = vector.load %arg3[%c0_198, %c0_199, %c512_200] : memref<1x1x1024xf32, #tpu.memory_space<vmem>>, vector<1x1x256xf32>
    %324 = vector.shape_cast %323 : vector<1x1x256xf32> to vector<1x256xf32>
    %c2_i32_201 = arith.constant 2 : i32
    %325 = arith.addi %0, %c2_i32_201 : i32
    %c9_i32_202 = arith.constant 9 : i32
    %326 = arith.muli %325, %c9_i32_202 : i32
    %c7_i32_203 = arith.constant 7 : i32
    %327 = arith.addi %326, %c7_i32_203 : i32
    %328 = arith.index_cast %327 : i32 to index
    %329 = memref.load %arg2[%328] : memref<36xf32, #tpu.memory_space<smem>>
    %330 = vector.broadcast %329 : f32 to vector<1x256xf32>
    %331 = arith.mulf %330, %324 : vector<1x256xf32>
    %332 = arith.addf %322, %331 : vector<1x256xf32>
    %c0_204 = arith.constant 0 : index
    %c0_205 = arith.constant 0 : index
    %c768_206 = arith.constant 768 : index
    %333 = vector.load %arg3[%c0_204, %c0_205, %c768_206] : memref<1x1x1024xf32, #tpu.memory_space<vmem>>, vector<1x1x256xf32>
    %334 = vector.shape_cast %333 : vector<1x1x256xf32> to vector<1x256xf32>
    %c3_i32_207 = arith.constant 3 : i32
    %335 = arith.addi %0, %c3_i32_207 : i32
    %c9_i32_208 = arith.constant 9 : i32
    %336 = arith.muli %335, %c9_i32_208 : i32
    %c7_i32_209 = arith.constant 7 : i32
    %337 = arith.addi %336, %c7_i32_209 : i32
    %338 = arith.index_cast %337 : i32 to index
    %339 = memref.load %arg2[%338] : memref<36xf32, #tpu.memory_space<smem>>
    %340 = vector.broadcast %339 : f32 to vector<1x256xf32>
    %341 = arith.mulf %340, %334 : vector<1x256xf32>
    %342 = arith.addf %332, %341 : vector<1x256xf32>
    %c223_i32 = arith.constant 223 : i32
    %343 = tpu.dynamic_rotate %342 by %c223_i32 dim 1 : vector<1x256xf32>, i32 -> vector<1x256xf32>
    %c0_210 = arith.constant 0 : index
    %c0_211 = arith.constant 0 : index
    %344 = vector.load %arg5[%c0_210, %c0_211] : memref<1x256xf32, #tpu.memory_space<vmem>>, vector<1x256xf32>
    %345 = arith.addf %344, %343 : vector<1x256xf32>
    %c0_212 = arith.constant 0 : index
    %c0_213 = arith.constant 0 : index
    %346 = vector.load %arg5[%c0_212, %c0_213] : memref<1x256xf32, #tpu.memory_space<vmem>>, vector<1x256xf32>
    tpu.vector_store %arg5[%c0_212, %c0_213], %345 {strides = array<i32>} : memref<1x256xf32, #tpu.memory_space<vmem>>, vector<1x256xf32>,
    %c0_214 = arith.constant 0 : index
    %c0_215 = arith.constant 0 : index
    %c0_216 = arith.constant 0 : index
    %347 = vector.load %arg3[%c0_214, %c0_215, %c0_216] : memref<1x1x1024xf32, #tpu.memory_space<vmem>>, vector<1x1x256xf32>
    %348 = vector.shape_cast %347 : vector<1x1x256xf32> to vector<1x256xf32>
    %c0_i32_217 = arith.constant 0 : i32
    %349 = arith.addi %0, %c0_i32_217 : i32
    %c9_i32_218 = arith.constant 9 : i32
    %350 = arith.muli %349, %c9_i32_218 : i32
    %c8_i32 = arith.constant 8 : i32
    %351 = arith.addi %350, %c8_i32 : i32
    %352 = arith.index_cast %351 : i32 to index
    %353 = memref.load %arg2[%352] : memref<36xf32, #tpu.memory_space<smem>>
    %354 = vector.broadcast %353 : f32 to vector<1x256xf32>
    %355 = arith.mulf %354, %348 : vector<1x256xf32>
    %c0_219 = arith.constant 0 : index
    %c0_220 = arith.constant 0 : index
    %c256_221 = arith.constant 256 : index
    %356 = vector.load %arg3[%c0_219, %c0_220, %c256_221] : memref<1x1x1024xf32, #tpu.memory_space<vmem>>, vector<1x1x256xf32>
    %357 = vector.shape_cast %356 : vector<1x1x256xf32> to vector<1x256xf32>
    %c1_i32_222 = arith.constant 1 : i32
    %358 = arith.addi %0, %c1_i32_222 : i32
    %c9_i32_223 = arith.constant 9 : i32
    %359 = arith.muli %358, %c9_i32_223 : i32
    %c8_i32_224 = arith.constant 8 : i32
    %360 = arith.addi %359, %c8_i32_224 : i32
    %361 = arith.index_cast %360 : i32 to index
    %362 = memref.load %arg2[%361] : memref<36xf32, #tpu.memory_space<smem>>
    %363 = vector.broadcast %362 : f32 to vector<1x256xf32>
    %364 = arith.mulf %363, %357 : vector<1x256xf32>
    %365 = arith.addf %355, %364 : vector<1x256xf32>
    %c0_225 = arith.constant 0 : index
    %c0_226 = arith.constant 0 : index
    %c512_227 = arith.constant 512 : index
    %366 = vector.load %arg3[%c0_225, %c0_226, %c512_227] : memref<1x1x1024xf32, #tpu.memory_space<vmem>>, vector<1x1x256xf32>
    %367 = vector.shape_cast %366 : vector<1x1x256xf32> to vector<1x256xf32>
    %c2_i32_228 = arith.constant 2 : i32
    %368 = arith.addi %0, %c2_i32_228 : i32
    %c9_i32_229 = arith.constant 9 : i32
    %369 = arith.muli %368, %c9_i32_229 : i32
    %c8_i32_230 = arith.constant 8 : i32
    %370 = arith.addi %369, %c8_i32_230 : i32
    %371 = arith.index_cast %370 : i32 to index
    %372 = memref.load %arg2[%371] : memref<36xf32, #tpu.memory_space<smem>>
    %373 = vector.broadcast %372 : f32 to vector<1x256xf32>
    %374 = arith.mulf %373, %367 : vector<1x256xf32>
    %375 = arith.addf %365, %374 : vector<1x256xf32>
    %c0_231 = arith.constant 0 : index
    %c0_232 = arith.constant 0 : index
    %c768_233 = arith.constant 768 : index
    %376 = vector.load %arg3[%c0_231, %c0_232, %c768_233] : memref<1x1x1024xf32, #tpu.memory_space<vmem>>, vector<1x1x256xf32>
    %377 = vector.shape_cast %376 : vector<1x1x256xf32> to vector<1x256xf32>
    %c3_i32_234 = arith.constant 3 : i32
    %378 = arith.addi %0, %c3_i32_234 : i32
    %c9_i32_235 = arith.constant 9 : i32
    %379 = arith.muli %378, %c9_i32_235 : i32
    %c8_i32_236 = arith.constant 8 : i32
    %380 = arith.addi %379, %c8_i32_236 : i32
    %381 = arith.index_cast %380 : i32 to index
    %382 = memref.load %arg2[%381] : memref<36xf32, #tpu.memory_space<smem>>
    %383 = vector.broadcast %382 : f32 to vector<1x256xf32>
    %384 = arith.mulf %383, %377 : vector<1x256xf32>
    %385 = arith.addf %375, %384 : vector<1x256xf32>
    %c222_i32 = arith.constant 222 : i32
    %386 = tpu.dynamic_rotate %385 by %c222_i32 dim 1 : vector<1x256xf32>, i32 -> vector<1x256xf32>
    %c0_237 = arith.constant 0 : index
    %c0_238 = arith.constant 0 : index
    %387 = vector.load %arg5[%c0_237, %c0_238] : memref<1x256xf32, #tpu.memory_space<vmem>>, vector<1x256xf32>
    %388 = arith.addf %387, %386 : vector<1x256xf32>
    %c0_239 = arith.constant 0 : index
    %c0_240 = arith.constant 0 : index
    %389 = vector.load %arg5[%c0_239, %c0_240] : memref<1x256xf32, #tpu.memory_space<vmem>>, vector<1x256xf32>
    tpu.vector_store %arg5[%c0_239, %c0_240], %388 {strides = array<i32>} : memref<1x256xf32, #tpu.memory_space<vmem>>, vector<1x256xf32>,
    %c0_i32_241 = arith.constant 0 : i32
    %390 = arith.cmpi eq, %arg1, %c0_i32_241 : i32
    %391 = arith.extui %390 : i1 to i32
    %c0_i32_242 = arith.constant 0 : i32
    %392 = arith.cmpi ne, %391, %c0_i32_242 : i32
    scf.if %392 {
      %c0_243 = arith.constant 0 : index
      %c0_244 = arith.constant 0 : index
      %393 = vector.load %arg5[%c0_243, %c0_244] : memref<1x256xf32, #tpu.memory_space<vmem>>, vector<1x256xf32>
      %cst = arith.constant 5.000000e-01 : f32
      %394 = vector.broadcast %cst : f32 to vector<1x256xf32>
      %395 = arith.mulf %394, %393 : vector<1x256xf32>
      %cst_245 = arith.constant 0.707106769 : f32
      %396 = vector.broadcast %cst_245 : f32 to vector<1x256xf32>
      %397 = arith.mulf %393, %396 : vector<1x256xf32>
      %398 = math.erf %397 : vector<1x256xf32>
      %cst_246 = arith.constant 1.000000e+00 : f32
      %399 = vector.broadcast %cst_246 : f32 to vector<1x256xf32>
      %400 = arith.addf %399, %398 : vector<1x256xf32>
      %401 = arith.mulf %395, %400 : vector<1x256xf32>
      %c0_247 = arith.constant 0 : index
      %c0_248 = arith.constant 0 : index
      %c0_249 = arith.constant 0 : index
      %402 = vector.load %arg4[%c0_247, %c0_248, %c0_249] : memref<1x1x256xf32, #tpu.memory_space<vmem>>, vector<1x1x256xf32>
      %403 = vector.shape_cast %402 : vector<1x1x256xf32> to vector<1x256xf32>
      %404 = vector.shape_cast %401 : vector<1x256xf32> to vector<1x1x256xf32>
      tpu.vector_store %arg4[%c0_247, %c0_248, %c0_249], %404 {strides = array<i32>} : memref<1x1x256xf32, #tpu.memory_space<vmem>>, vector<1x1x256xf32>,
    } else {
    }
    return
  }
  func.func @transform_0(%arg0: i32, %arg1: i32) -> i32 {
    %c0_i32 = arith.constant 0 : i32
    %c0_i32_0 = arith.constant 0 : i32
    return %c0_i32 : i32
  }
  func.func @transform_1(%arg0: i32, %arg1: i32) -> (i32, i32, i32) {
    %c0_i32 = arith.constant 0 : i32
    %c0_i32_0 = arith.constant 0 : i32
    return %arg0, %c0_i32, %arg1 : i32, i32, i32
  }
  func.func @transform_2(%arg0: i32, %arg1: i32) -> (i32, i32, i32) {
    %c0_i32 = arith.constant 0 : i32
    %c0_i32_0 = arith.constant 0 : i32
    %c0_i32_1 = arith.constant 0 : i32
    return %arg0, %c0_i32, %c0_i32_0 : i32, i32, i32
  }
}

</mosaic_0001>

<llo_original>
// kernel: tpu_custom_call.1
$region0: #{tpu_custom_call.1}
  #allocation0 [shape = 'u32[]', space=smem, size = 0x4, offset = 0x4, fixed_abs, tag = 'smem constant byte address 0x4 - core index']
  #allocation1 [shape = 'u32[144,128]{1,0:T(1,128)}', space=vmem, size = 0x12000, scoped, tag = 'internal scratch']
  #allocation2 [shape = 'f32[1,256]{1,0:T(1,128)}', space=vmem, size = 0x400, scoped, tag = 'scratch operand']
  %s0 = inlined_call_operand.hbm [shape: f32[36], index: 0, kind: input, shape index: {}]
  %s1 = inlined_call_operand.hbm [shape: f32[2,1,1024], index: 1, kind: input, shape index: {}]
  %s2 = inlined_call_operand.hbm [shape: f32[2,1,256], index: 2, kind: output, shape index: {}]
  %s3 = sld [smem:[#allocation0]]
  $region57: #{tpu_custom_call.1} parent=0
    _
  %s5 = ssub.s32 1, %s3
  %s6 = scalar_select 0, %s5, %s3
  $region1: #{tpu_custom_call.1} parent=0
    #allocation3 [shape = 'u8[512]{0}', space=smem, size = 0x200, scoped, tag = 'input window, operand 0, single buffered']
    #allocation4 [shape = 's32[2]{0}', space=sflag, size = 0x8, scoped, tag = 'scoped memory for tpu_custom_call.1']
    #allocation5 [shape = 's32[2]{0}', space=sflag, size = 0x8, scoped, tag = 'scoped memory for tpu_custom_call.1']
    #allocation6 [shape = 's32[2]{0}', space=sflag, size = 0x8, scoped, tag = 'scoped memory for tpu_custom_call.1']
    #allocation7 [shape = 'u8[8192]{0}', space=vmem, size = 0x2000, scoped, tag = 'input window, operand 1']
    #allocation8 [shape = 'u8[2048]{0}', space=vmem, size = 0x800, scoped, tag = 'output window, operand 0']
    %7 = vsyncpa [#allocation6], 0
    %8 = vsyncpa [#allocation4], 0
    %s9 = scalar_lea.sflag [#allocation4], 1
    %10 = vsyncpa %s9, 0
    %11 = vsyncpa [#allocation5], 0
    %s12 = scalar_lea.sflag [#allocation5], 1
    %13 = vsyncpa %s12, 0
    loop: start=0, step=1, limit=4
    $region2: #{tpu_custom_call.1} parent=1 // loop_pre_header
      _
    $region3: #{tpu_custom_call.1} parent=1 // loop_header
      %s15 = sphi 0, %s19
      %p16 = scmp.ge.s32.totalorder %s15, 4
      %s22 = sphi 0, %s34
      %s23 = sphi 0, %s30
      %s24 = sphi 0, %s22
      %s25 = sphi 0, %s23
      %s26 = sphi 0, %s24
      %s27 = sphi 0, %s25
      %s35 = sphi 0, %s35
      %s37 = sphi 0, %s35
      %s38 = sphi 0, %s37
      %s52 = sphi 0, %s38
      %s60 = sphi 0, %s62
      %s63 = sphi 0, %s60
      %s64 = sphi 0, %s63
      %s80 = sphi 0, %s64
      %s86 = sphi 0, %s88
      %s89 = sphi 0, %s86
      %s90 = sphi 0, %s89
      %s106 = sphi 0, %s90
    $region4: #{tpu_custom_call.1} parent=1 // loop_header_branch
      %18 = sbr.rel (%p16) target = $region8
    $region5: #{tpu_custom_call.1} parent=1 // loop_body
      %s20 = ssub.s32 %s15, 1
      %s21 = ssub.s32 %s15, 2
      %s28 = sadd.s32 1, %s23
      %p29 = scmp.ge.s32.totalorder %s28, 1
      %s30 = scalar_select %p29, 0, %s28
      %s31 = sadd.s32 1, %s22
      %s32 = scalar_select %p29, %s31, %s22
      %p33 = scmp.ge.s32.totalorder %s32, 2
      %s34 = scalar_select %p33, 0, %s32
      %s36 = sadd.s32 %s35, 1
      %p39 = scmp.eq.s32.totalorder %s15, 1
      %p40 = scmp.ne.s32.totalorder %s35, %s37
      %p41 = scmp.eq.s32.totalorder %s15, 0
      %p42 = por %p40, %p41
      %p43 = scmp.ne.s32.totalorder %s35, %s37
      %p44 = scmp.eq.s32.totalorder %s20, 1
      %p45 = por %p43, %p44
      %p46 = scmp.ne.s32.totalorder %s37, %s38
      %p47 = scmp.eq.s32.totalorder %s20, 0
      %p48 = por %p46, %p47
      %p49 = scmp.ne.s32.totalorder %s37, %s38
      %p50 = scmp.eq.s32.totalorder %s21, 1
      %p51 = por %p49, %p50
      %p53 = scmp.ne.s32.totalorder %s38, %s52
      %p54 = scmp.eq.s32.totalorder %s21, 0
      %p55 = por %p53, %p54
      %s56 = ssub.s32 %s22, %s34
      %s57 = ssub.s32 %s23, %s30
      %s58 = sor.u32 %s56, %s57
      %p59 = scmp.eq.s32.totalorder %s58, 0
      %s61 = sadd.s32 %s60, 1
      %s62 = scalar_select %p59, %s60, %s61
      %p65 = pneg %p59
      %p66 = scmp.eq.s32.totalorder %s15, 1
      %p67 = por %p65, %p66
      %p68 = scmp.ne.s32.totalorder %s60, %s63
      %p69 = scmp.eq.s32.totalorder %s15, 0
      %p70 = por %p68, %p69
      %p71 = scmp.ne.s32.totalorder %s60, %s63
      %p72 = scmp.eq.s32.totalorder %s20, 1
      %p73 = por %p71, %p72
      %p74 = scmp.ne.s32.totalorder %s63, %s64
      %p75 = scmp.eq.s32.totalorder %s20, 0
      %p76 = por %p74, %p75
      %p77 = scmp.ne.s32.totalorder %s63, %s64
      %p78 = scmp.eq.s32.totalorder %s21, 1
      %p79 = por %p77, %p78
      %p81 = scmp.ne.s32.totalorder %s64, %s80
      %p82 = scmp.eq.s32.totalorder %s21, 0
      %p83 = por %p81, %p82
      %s84 = ssub.s32 %s22, %s34
      %p85 = scmp.eq.s32.totalorder %s84, 0
      %s87 = sadd.s32 %s86, 1
      %s88 = scalar_select %p85, %s86, %s87
      %p91 = pneg %p85
      %p92 = scmp.eq.s32.totalorder %s15, 1
      %p93 = por %p91, %p92
      %p94 = scmp.ne.s32.totalorder %s86, %s89
      %p95 = scmp.eq.s32.totalorder %s15, 0
      %p96 = por %p94, %p95
      %p97 = scmp.ne.s32.totalorder %s86, %s89
      %p98 = scmp.eq.s32.totalorder %s20, 1
      %p99 = por %p97, %p98
      %p100 = scmp.ne.s32.totalorder %s89, %s90
      %p101 = scmp.eq.s32.totalorder %s20, 0
      %p102 = por %p100, %p101
      %p103 = scmp.ne.s32.totalorder %s89, %s90
      %p104 = scmp.eq.s32.totalorder %s21, 1
      %p105 = por %p103, %p104
      %p107 = scmp.ne.s32.totalorder %s90, %s106
      %p108 = scmp.eq.s32.totalorder %s21, 0
      %p109 = por %p107, %p108
      %p110 = scmp.le.s32.totalorder 1, %s15
      %p111 = scmp.lt.s32.totalorder %s15, 3
      %p112 = pnand %p110, %p111
      %p113 = pneg %p112
      // Predicated region
      $region9: #{tpu_custom_call.1} parent=5 // pred_check
        _
      $region10: #{tpu_custom_call.1} parent=5 // pred_check_branch
        %115 = sbr.rel (%p112) target = $region12
      $region11: #{tpu_custom_call.1} parent=5 // pred_region
        %s116 = ssub.s32 %s15, 1
        // Predicated region
        $region13: #{tpu_custom_call.1} parent=11 // pred_check
          %p117 = pneg %p48
        $region14: #{tpu_custom_call.1} parent=11 // pred_check_branch
          %119 = sbr.rel (%p117) target = $region16
        $region15: #{tpu_custom_call.1} parent=11 // pred_region
          %s121 = ssub.s32 16, 16
          %122 = vsyncadd [#allocation6], %s121
          %125 = dma.hbm_to_smem %s0, 16, [#allocation3], [#allocation6]
        $region16: #{tpu_custom_call.1} parent=11 // pred_fallthru
          _
      $region12: #{tpu_custom_call.1} parent=5 // pred_fallthru
        _
      %p126 = scmp.lt.s32.totalorder %s15, 2
      // Predicated region
      $region17: #{tpu_custom_call.1} parent=5 // pred_check
        %p127 = pneg %p126
      $region18: #{tpu_custom_call.1} parent=5 // pred_check_branch
        %129 = sbr.rel (%p127) target = $region20
      $region19: #{tpu_custom_call.1} parent=5 // pred_region
        // Predicated region
        $region21: #{tpu_custom_call.1} parent=19 // pred_check
          %p130 = pneg %p70
        $region22: #{tpu_custom_call.1} parent=19 // pred_check_branch
          %132 = sbr.rel (%p130) target = $region24
        $region23: #{tpu_custom_call.1} parent=19 // pred_region
          %s133 = sand.u32 %s60, 1
          %s134 = scalar_lea.sflag [#allocation4], %s133
          %s135 = sand.u32 %s60, 1
          %s136 = smul.addr %s135, 8
          %s137 = scalar_lea.vmem [#allocation7], %s136
          %s138 = smul.u32 8, %s23
          %s140 = ssub.s32 128, 128
          %141 = vsyncadd %s134, %s140
          %s142 = smul.addr %s22, 8
          %s143 = sadd.s32 %s138, %s142
          %s144 = smul.addr %s143, 16
          %s145 = scalar_lea.hbm %s1, %s144
          %s147 = sshll.u32 %s137, 4
          %s148 = int_to_ptr.vmem [resolvable:$true] %s147
          %150 = dma.hbm_to_vmem [thread:$0]  %s145, 128, %s148, %s134
        $region24: #{tpu_custom_call.1} parent=19 // pred_fallthru
          _
      $region20: #{tpu_custom_call.1} parent=5 // pred_fallthru
        _
      %p151 = scmp.le.s32.totalorder 1, %s15
      %p152 = scmp.lt.s32.totalorder %s15, 3
      %p153 = pnand %p151, %p152
      %p154 = pneg %p153
      // Predicated region
      $region25: #{tpu_custom_call.1} parent=5 // pred_check
        _
      $region26: #{tpu_custom_call.1} parent=5 // pred_check_branch
        %156 = sbr.rel (%p153) target = $region28
      $region27: #{tpu_custom_call.1} parent=5 // pred_region
        %s157 = ssub.s32 %s15, 1
        // Predicated region
        $region29: #{tpu_custom_call.1} parent=27 // pred_check
          %p158 = pneg %p48
        $region30: #{tpu_custom_call.1} parent=27 // pred_check_branch
          %160 = sbr.rel (%p158) target = $region32
        $region31: #{tpu_custom_call.1} parent=27 // pred_region
          %161 = dma.done [#allocation6], 16
        $region32: #{tpu_custom_call.1} parent=27 // pred_fallthru
          _
        %s162 = sand.u32 %s63, 1
        %s163 = scalar_lea.sflag [#allocation4], %s162
        %s164 = sand.u32 %s63, 1
        %s165 = smul.addr %s164, 8
        %s166 = scalar_lea.vmem [#allocation7], %s165
        // Predicated region
        $region33: #{tpu_custom_call.1} parent=27 // pred_check
          %p167 = pneg %p76
        $region34: #{tpu_custom_call.1} parent=27 // pred_check_branch
          %169 = sbr.rel (%p167) target = $region36
        $region35: #{tpu_custom_call.1} parent=27 // pred_region
          %170 = dma.done %s163, 128
        $region36: #{tpu_custom_call.1} parent=27 // pred_fallthru
          _
        %171 = sfence
        %p172 = pneg %p48
        %p173 = pneg %p45
        %s174 = sand.u32 %s63, 1
        %s175 = scalar_lea.sflag [#allocation4], %s174
        %s176 = sand.u32 %s63, 1
        %s177 = smul.addr %s176, 8
        %s178 = scalar_lea.vmem [#allocation7], %s177
        %p179 = pneg %p76
        %p180 = pneg %p73
        %p181 = pneg %p102
        %p182 = pneg %p99
        %s183 = sand.u32 %s89, 1
        %s184 = scalar_lea.sflag [#allocation5], %s183
        %s185 = sand.u32 %s89, 1
        %s186 = smul.addr %s185, 2
        %s187 = scalar_lea.vmem [#allocation8], %s186
        %s188 = smul.u32 8, %s25
        %s189 = smul.u32 %s25, 4
        %p190 = scmp.eq.s32.totalorder %s25, 0
        // Predicated region
        $region37: #{tpu_custom_call.1} parent=27 // pred_check
          %p191 = pneg %p190
        $region38: #{tpu_custom_call.1} parent=27 // pred_check_branch
          %193 = sbr.rel (%p191) target = $region40
        $region39: #{tpu_custom_call.1} parent=27 // pred_region
          %v194 = vlaneseq
          %vm195 = vcmp.ge.s32.totalorder %v194, 0
          %vm196 = vcmp.lt.s32.totalorder %v194, 256
          %vm197 = vmand %vm195, %vm196
          %198 = vst.msk [vmem:[#allocation2] sm:$0x3] %vm197, 0.0
        $region40: #{tpu_custom_call.1} parent=27 // pred_fallthru
          _
        %v199 = vld [vmem:[%s166] sm:$0x3]
        %s200 = smul.u32 %s25, 36
        %s201 = sld [smem:[#allocation3 + %s200]]
        %v202 = vstv %s201
        %v203 = vmul.f32 %v202, %v199
        %v204 = vld [vmem:[%s166 + $0x2] sm:$0x3]
        %s205 = sadd.s32 %s189, 1
        %s206 = smul.u32 %s205, 9
        %s207 = sld [smem:[#allocation3 + %s206]]
        %v208 = vstv %s207
        %v209 = vmul.f32 %v208, %v204
        %v210 = vadd.f32 %v203, %v209
        %v211 = vld [vmem:[%s166 + $0x4] sm:$0x3]
        %s212 = sadd.s32 %s189, 2
        %s213 = smul.u32 %s212, 9
        %s214 = sld [smem:[#allocation3 + %s213]]
        %v215 = vstv %s214
        %v216 = vmul.f32 %v215, %v211
        %v217 = vadd.f32 %v210, %v216
        %v218 = vld [vmem:[%s166 + $0x6] sm:$0x3]
        %s219 = sadd.s32 %s189, 3
        %s220 = smul.u32 %s219, 9
        %s221 = sld [smem:[#allocation3 + %s220]]
        %v222 = vstv %s221
        %v223 = vmul.f32 %v222, %v218
        %v224 = vadd.f32 %v217, %v223
        %v225 = vld [vmem:[#allocation2] sm:$0x3]
        %v226 = vadd.f32 %v225, %v224
        %v227 = vlaneseq
        %vm228 = vcmp.ge.s32.totalorder %v227, 0
        %vm229 = vcmp.lt.s32.totalorder %v227, 256
        %vm230 = vmand %vm228, %vm229
        %231 = vst.msk [vmem:[#allocation2] sm:$0x3] %vm230, %v226
        %v232 = vld [vmem:[%s166] sm:$0x3]
        %s233 = sadd.s32 %s200, 1
        %s234 = sld [smem:[#allocation3 + %s233]]
        %v235 = vstv %s234
        %v236 = vmul.f32 %v235, %v232
        %v237 = vld [vmem:[%s166 + $0x2] sm:$0x3]
        %s238 = sadd.s32 %s206, 1
        %s239 = sld [smem:[#allocation3 + %s238]]
        %v240 = vstv %s239
        %v241 = vmul.f32 %v240, %v237
        %v242 = vadd.f32 %v236, %v241
        %v243 = vld [vmem:[%s166 + $0x4] sm:$0x3]
        %s244 = sadd.s32 %s213, 1
        %s245 = sld [smem:[#allocation3 + %s244]]
        %v246 = vstv %s245
        %v247 = vmul.f32 %v246, %v243
        %v248 = vadd.f32 %v242, %v247
        %v249 = vld [vmem:[%s166 + $0x6] sm:$0x3]
        %s250 = sadd.s32 %s220, 1
        %s251 = sld [smem:[#allocation3 + %s250]]
        %v252 = vstv %s251
        %v253 = vmul.f32 %v252, %v249
        %v254 = vadd.f32 %v248, %v253
        %v256 = vlaneseq
        %v257 = vshrl.u32 %v256, 7
        %v258 = vsub.s32 0, %v257
        %v259 = vrot.slane %v254, %v258
        %v260 = vlaneseq
        %v261 = vshrl.u32 %v260, 7
        %v262 = vsub.s32 1, %v261
        %v263 = vrot.slane %v254, %v262
        %266 = vrot.lane.b32.xlu0 %v259, 127
        %v267 = vpop.permute.xlu0 %266
        %268 = vrot.lane.b32.xlu0 %v263, 127
        %v269 = vpop.permute.xlu0 %268
        %v270 = vlaneseq
        %v271 = vand.u32 %v270, 127
        %vm272 = vcmp.lt.s32.totalorder %v271, 127
        %v273 = vsel %vm272, %v267, %v269
        %v274 = vsel %vm272, %v269, %v267
        %v275 = vld [vmem:[#allocation2] sm:$0x3]
        %v278 = vcombine.low %v273, %v274
        %v280 = vunpack.c.l.s4 1966171168
        %v281 = vunpack.c.0.s8 %v280
        %v282 = vlaneseq
        %v283 = vshrl.u32 %v282, 7
        %v284 = vsub.s32 %v281, %v283
        %v285 = vrot.slane %v278, %v284
        %v287 = vunpack.c.l.s4 1966171168
        %v288 = vunpack.c.0.s8 %v287
        %v289 = vlaneseq
        %v290 = vshrl.u32 %v289, 7
        %v291 = vsub.s32 %v288, %v290
        %v292 = vrot.slane %v285, %v291
        %v294 = vadd.f32 %v275, %v292
        %295 = vst.msk [vmem:[#allocation2] sm:$0x3] %vm230, %v294
        %v296 = vld [vmem:[%s166] sm:$0x3]
        %s297 = sadd.s32 %s200, 2
        %s298 = sld [smem:[#allocation3 + %s297]]
        %v299 = vstv %s298
        %v300 = vmul.f32 %v299, %v296
        %v301 = vld [vmem:[%s166 + $0x2] sm:$0x3]
        %s302 = sadd.s32 %s206, 2
        %s303 = sld [smem:[#allocation3 + %s302]]
        %v304 = vstv %s303
        %v305 = vmul.f32 %v304, %v301
        %v306 = vadd.f32 %v300, %v305
        %v307 = vld [vmem:[%s166 + $0x4] sm:$0x3]
        %s308 = sadd.s32 %s213, 2
        %s309 = sld [smem:[#allocation3 + %s308]]
        %v310 = vstv %s309
        %v311 = vmul.f32 %v310, %v307
        %v312 = vadd.f32 %v306, %v311
        %v313 = vld [vmem:[%s166 + $0x6] sm:$0x3]
        %s314 = sadd.s32 %s220, 2
        %s315 = sld [smem:[#allocation3 + %s314]]
        %v316 = vstv %s315
        %v317 = vmul.f32 %v316, %v313
        %v318 = vadd.f32 %v312, %v317
        %v320 = vlaneseq
        %v321 = vshrl.u32 %v320, 7
        %v322 = vsub.s32 0, %v321
        %v323 = vrot.slane %v318, %v322
        %v324 = vlaneseq
        %v325 = vshrl.u32 %v324, 7
        %v326 = vsub.s32 1, %v325
        %v327 = vrot.slane %v318, %v326
        %330 = vrot.lane.b32.xlu0 %v323, 126
        %v331 = vpop.permute.xlu0 %330
        %332 = vrot.lane.b32.xlu0 %v327, 126
        %v333 = vpop.permute.xlu0 %332
        %vm334 = vcmp.lt.s32.totalorder %v271, 126
        %v335 = vsel %vm334, %v331, %v333
        %v336 = vsel %vm334, %v333, %v331
        %v337 = vld [vmem:[#allocation2] sm:$0x3]
        %v340 = vcombine.low %v335, %v336
        %v342 = vunpack.c.l.s4 1966171168
        %v343 = vunpack.c.0.s8 %v342
        %v344 = vlaneseq
        %v345 = vshrl.u32 %v344, 7
        %v346 = vsub.s32 %v343, %v345
        %v347 = vrot.slane %v340, %v346
        %v349 = vunpack.c.l.s4 1966171168
        %v350 = vunpack.c.0.s8 %v349
        %v351 = vlaneseq
        %v352 = vshrl.u32 %v351, 7
        %v353 = vsub.s32 %v350, %v352
        %v354 = vrot.slane %v347, %v353
        %v356 = vadd.f32 %v337, %v354
        %357 = vst.msk [vmem:[#allocation2] sm:$0x3] %vm230, %v356
        %v358 = vld [vmem:[%s166] sm:$0x3]
        %s359 = sadd.s32 %s200, 3
        %s360 = sld [smem:[#allocation3 + %s359]]
        %v361 = vstv %s360
        %v362 = vmul.f32 %v361, %v358
        %v363 = vld [vmem:[%s166 + $0x2] sm:$0x3]
        %s364 = sadd.s32 %s206, 3
        %s365 = sld [smem:[#allocation3 + %s364]]
        %v366 = vstv %s365
        %v367 = vmul.f32 %v366, %v363
        %v368 = vadd.f32 %v362, %v367
        %v369 = vld [vmem:[%s166 + $0x4] sm:$0x3]
        %s370 = sadd.s32 %s213, 3
        %s371 = sld [smem:[#allocation3 + %s370]]
        %v372 = vstv %s371
        %v373 = vmul.f32 %v372, %v369
        %v374 = vadd.f32 %v368, %v373
        %v375 = vld [vmem:[%s166 + $0x6] sm:$0x3]
        %s376 = sadd.s32 %s220, 3
        %s377 = sld [smem:[#allocation3 + %s376]]
        %v378 = vstv %s377
        %v379 = vmul.f32 %v378, %v375
        %v380 = vadd.f32 %v374, %v379
        %v382 = vlaneseq
        %v383 = vshrl.u32 %v382, 7
        %v384 = vsub.s32 0, %v383
        %v385 = vrot.slane %v380, %v384
        %v386 = vlaneseq
        %v387 = vshrl.u32 %v386, 7
        %v388 = vsub.s32 1, %v387
        %v389 = vrot.slane %v380, %v388
        %392 = vrot.lane.b32.xlu0 %v385, 112
        %v393 = vpop.permute.xlu0 %392
        %394 = vrot.lane.b32.xlu0 %v389, 112
        %v395 = vpop.permute.xlu0 %394
        %vm396 = vcmp.lt.s32.totalorder %v271, 112
        %v397 = vsel %vm396, %v393, %v395
        %v398 = vsel %vm396, %v395, %v393
        %v399 = vld [vmem:[#allocation2] sm:$0x3]
        %v402 = vcombine.low %v397, %v398
        %v404 = vunpack.c.l.s4 1966171168
        %v405 = vunpack.c.0.s8 %v404
        %v406 = vlaneseq
        %v407 = vshrl.u32 %v406, 7
        %v408 = vsub.s32 %v405, %v407
        %v409 = vrot.slane %v402, %v408
        %v411 = vunpack.c.l.s4 1966171168
        %v412 = vunpack.c.0.s8 %v411
        %v413 = vlaneseq
        %v414 = vshrl.u32 %v413, 7
        %v415 = vsub.s32 %v412, %v414
        %v416 = vrot.slane %v409, %v415
        %v418 = vadd.f32 %v399, %v416
        %419 = vst.msk [vmem:[#allocation2] sm:$0x3] %vm230, %v418
        %v420 = vld [vmem:[%s166] sm:$0x3]
        %s421 = sadd.s32 %s200, 4
        %s422 = sld [smem:[#allocation3 + %s421]]
        %v423 = vstv %s422
        %v424 = vmul.f32 %v423, %v420
        %v425 = vld [vmem:[%s166 + $0x2] sm:$0x3]
        %s426 = sadd.s32 %s206, 4
        %s427 = sld [smem:[#allocation3 + %s426]]
        %v428 = vstv %s427
        %v429 = vmul.f32 %v428, %v425
        %v430 = vadd.f32 %v424, %v429
        %v431 = vld [vmem:[%s166 + $0x4] sm:$0x3]
        %s432 = sadd.s32 %s213, 4
        %s433 = sld [smem:[#allocation3 + %s432]]
        %v434 = vstv %s433
        %v435 = vmul.f32 %v434, %v431
        %v436 = vadd.f32 %v430, %v435
        %v437 = vld [vmem:[%s166 + $0x6] sm:$0x3]
        %s438 = sadd.s32 %s220, 4
        %s439 = sld [smem:[#allocation3 + %s438]]
        %v440 = vstv %s439
        %v441 = vmul.f32 %v440, %v437
        %v442 = vadd.f32 %v436, %v441
        %v444 = vlaneseq
        %v445 = vshrl.u32 %v444, 7
        %v446 = vsub.s32 0, %v445
        %v447 = vrot.slane %v442, %v446
        %v448 = vlaneseq
        %v449 = vshrl.u32 %v448, 7
        %v450 = vsub.s32 1, %v449
        %v451 = vrot.slane %v442, %v450
        %454 = vrot.lane.b32.xlu0 %v447, 111
        %v455 = vpop.permute.xlu0 %454
        %456 = vrot.lane.b32.xlu0 %v451, 111
        %v457 = vpop.permute.xlu0 %456
        %vm458 = vcmp.lt.s32.totalorder %v271, 111
        %v459 = vsel %vm458, %v455, %v457
        %v460 = vsel %vm458, %v457, %v455
        %v461 = vld [vmem:[#allocation2] sm:$0x3]
        %v464 = vcombine.low %v459, %v460
        %v466 = vunpack.c.l.s4 1966171168
        %v467 = vunpack.c.0.s8 %v466
        %v468 = vlaneseq
        %v469 = vshrl.u32 %v468, 7
        %v470 = vsub.s32 %v467, %v469
        %v471 = vrot.slane %v464, %v470
        %v473 = vunpack.c.l.s4 1966171168
        %v474 = vunpack.c.0.s8 %v473
        %v475 = vlaneseq
        %v476 = vshrl.u32 %v475, 7
        %v477 = vsub.s32 %v474, %v476
        %v478 = vrot.slane %v471, %v477
        %v480 = vadd.f32 %v461, %v478
        %481 = vst.msk [vmem:[#allocation2] sm:$0x3] %vm230, %v480
        %v482 = vld [vmem:[%s166] sm:$0x3]
        %s483 = sadd.s32 %s200, 5
        %s484 = sld [smem:[#allocation3 + %s483]]
        %v485 = vstv %s484
        %v486 = vmul.f32 %v485, %v482
        %v487 = vld [vmem:[%s166 + $0x2] sm:$0x3]
        %s488 = sadd.s32 %s206, 5
        %s489 = sld [smem:[#allocation3 + %s488]]
        %v490 = vstv %s489
        %v491 = vmul.f32 %v490, %v487
        %v492 = vadd.f32 %v486, %v491
        %v493 = vld [vmem:[%s166 + $0x4] sm:$0x3]
        %s494 = sadd.s32 %s213, 5
        %s495 = sld [smem:[#allocation3 + %s494]]
        %v496 = vstv %s495
        %v497 = vmul.f32 %v496, %v493
        %v498 = vadd.f32 %v492, %v497
        %v499 = vld [vmem:[%s166 + $0x6] sm:$0x3]
        %s500 = sadd.s32 %s220, 5
        %s501 = sld [smem:[#allocation3 + %s500]]
        %v502 = vstv %s501
        %v503 = vmul.f32 %v502, %v499
        %v504 = vadd.f32 %v498, %v503
        %v506 = vlaneseq
        %v507 = vshrl.u32 %v506, 7
        %v508 = vsub.s32 0, %v507
        %v509 = vrot.slane %v504, %v508
        %v510 = vlaneseq
        %v511 = vshrl.u32 %v510, 7
        %v512 = vsub.s32 1, %v511
        %v513 = vrot.slane %v504, %v512
        %516 = vrot.lane.b32.xlu0 %v509, 110
        %v517 = vpop.permute.xlu0 %516
        %518 = vrot.lane.b32.xlu0 %v513, 110
        %v519 = vpop.permute.xlu0 %518
        %vm520 = vcmp.lt.s32.totalorder %v271, 110
        %v521 = vsel %vm520, %v517, %v519
        %v522 = vsel %vm520, %v519, %v517
        %v523 = vld [vmem:[#allocation2] sm:$0x3]
        %v526 = vcombine.low %v521, %v522
        %v528 = vunpack.c.l.s4 1966171168
        %v529 = vunpack.c.0.s8 %v528
        %v530 = vlaneseq
        %v531 = vshrl.u32 %v530, 7
        %v532 = vsub.s32 %v529, %v531
        %v533 = vrot.slane %v526, %v532
        %v535 = vunpack.c.l.s4 1966171168
        %v536 = vunpack.c.0.s8 %v535
        %v537 = vlaneseq
        %v538 = vshrl.u32 %v537, 7
        %v539 = vsub.s32 %v536, %v538
        %v540 = vrot.slane %v533, %v539
        %v542 = vadd.f32 %v523, %v540
        %543 = vst.msk [vmem:[#allocation2] sm:$0x3] %vm230, %v542
        %v544 = vld [vmem:[%s166] sm:$0x3]
        %s545 = sadd.s32 %s200, 6
        %s546 = sld [smem:[#allocation3 + %s545]]
        %v547 = vstv %s546
        %v548 = vmul.f32 %v547, %v544
        %v549 = vld [vmem:[%s166 + $0x2] sm:$0x3]
        %s550 = sadd.s32 %s206, 6
        %s551 = sld [smem:[#allocation3 + %s550]]
        %v552 = vstv %s551
        %v553 = vmul.f32 %v552, %v549
        %v554 = vadd.f32 %v548, %v553
        %v555 = vld [vmem:[%s166 + $0x4] sm:$0x3]
        %s556 = sadd.s32 %s213, 6
        %s557 = sld [smem:[#allocation3 + %s556]]
        %v558 = vstv %s557
        %v559 = vmul.f32 %v558, %v555
        %v560 = vadd.f32 %v554, %v559
        %v561 = vld [vmem:[%s166 + $0x6] sm:$0x3]
        %s562 = sadd.s32 %s220, 6
        %s563 = sld [smem:[#allocation3 + %s562]]
        %v564 = vstv %s563
        %v565 = vmul.f32 %v564, %v561
        %v566 = vadd.f32 %v560, %v565
        %v568 = vlaneseq
        %v569 = vshrl.u32 %v568, 7
        %v570 = vsub.s32 0, %v569
        %v571 = vrot.slane %v566, %v570
        %v572 = vlaneseq
        %v573 = vshrl.u32 %v572, 7
        %v574 = vsub.s32 1, %v573
        %v575 = vrot.slane %v566, %v574
        %578 = vrot.lane.b32.xlu0 %v571, 96
        %v579 = vpop.permute.xlu0 %578
        %580 = vrot.lane.b32.xlu0 %v575, 96
        %v581 = vpop.permute.xlu0 %580
        %vm582 = vcmp.lt.s32.totalorder %v271, 96
        %v583 = vsel %vm582, %v579, %v581
        %v584 = vsel %vm582, %v581, %v579
        %v585 = vld [vmem:[#allocation2] sm:$0x3]
        %v588 = vcombine.low %v583, %v584
        %v590 = vunpack.c.l.s4 1966171168
        %v591 = vunpack.c.0.s8 %v590
        %v592 = vlaneseq
        %v593 = vshrl.u32 %v592, 7
        %v594 = vsub.s32 %v591, %v593
        %v595 = vrot.slane %v588, %v594
        %v597 = vunpack.c.l.s4 1966171168
        %v598 = vunpack.c.0.s8 %v597
        %v599 = vlaneseq
        %v600 = vshrl.u32 %v599, 7
        %v601 = vsub.s32 %v598, %v600
        %v602 = vrot.slane %v595, %v601
        %v604 = vadd.f32 %v585, %v602
        %605 = vst.msk [vmem:[#allocation2] sm:$0x3] %vm230, %v604
        %v606 = vld [vmem:[%s166] sm:$0x3]
        %s607 = sadd.s32 %s200, 7
        %s608 = sld [smem:[#allocation3 + %s607]]
        %v609 = vstv %s608
        %v610 = vmul.f32 %v609, %v606
        %v611 = vld [vmem:[%s166 + $0x2] sm:$0x3]
        %s612 = sadd.s32 %s206, 7
        %s613 = sld [smem:[#allocation3 + %s612]]
        %v614 = vstv %s613
        %v615 = vmul.f32 %v614, %v611
        %v616 = vadd.f32 %v610, %v615
        %v617 = vld [vmem:[%s166 + $0x4] sm:$0x3]
        %s618 = sadd.s32 %s213, 7
        %s619 = sld [smem:[#allocation3 + %s618]]
        %v620 = vstv %s619
        %v621 = vmul.f32 %v620, %v617
        %v622 = vadd.f32 %v616, %v621
        %v623 = vld [vmem:[%s166 + $0x6] sm:$0x3]
        %s624 = sadd.s32 %s220, 7
        %s625 = sld [smem:[#allocation3 + %s624]]
        %v626 = vstv %s625
        %v627 = vmul.f32 %v626, %v623
        %v628 = vadd.f32 %v622, %v627
        %v630 = vlaneseq
        %v631 = vshrl.u32 %v630, 7
        %v632 = vsub.s32 0, %v631
        %v633 = vrot.slane %v628, %v632
        %v634 = vlaneseq
        %v635 = vshrl.u32 %v634, 7
        %v636 = vsub.s32 1, %v635
        %v637 = vrot.slane %v628, %v636
        %640 = vrot.lane.b32.xlu0 %v633, 95
        %v641 = vpop.permute.xlu0 %640
        %642 = vrot.lane.b32.xlu0 %v637, 95
        %v643 = vpop.permute.xlu0 %642
        %vm644 = vcmp.lt.s32.totalorder %v271, 95
        %v645 = vsel %vm644, %v641, %v643
        %v646 = vsel %vm644, %v643, %v641
        %v647 = vld [vmem:[#allocation2] sm:$0x3]
        %v650 = vcombine.low %v645, %v646
        %v652 = vunpack.c.l.s4 1966171168
        %v653 = vunpack.c.0.s8 %v652
        %v654 = vlaneseq
        %v655 = vshrl.u32 %v654, 7
        %v656 = vsub.s32 %v653, %v655
        %v657 = vrot.slane %v650, %v656
        %v659 = vunpack.c.l.s4 1966171168
        %v660 = vunpack.c.0.s8 %v659
        %v661 = vlaneseq
        %v662 = vshrl.u32 %v661, 7
        %v663 = vsub.s32 %v660, %v662
        %v664 = vrot.slane %v657, %v663
        %v666 = vadd.f32 %v647, %v664
        %667 = vst.msk [vmem:[#allocation2] sm:$0x3] %vm230, %v666
        %v668 = vld [vmem:[%s166] sm:$0x3]
        %s669 = sadd.s32 %s200, 8
        %s670 = sld [smem:[#allocation3 + %s669]]
        %v671 = vstv %s670
        %v672 = vmul.f32 %v671, %v668
        %v673 = vld [vmem:[%s166 + $0x2] sm:$0x3]
        %s674 = sadd.s32 %s206, 8
        %s675 = sld [smem:[#allocation3 + %s674]]
        %v676 = vstv %s675
        %v677 = vmul.f32 %v676, %v673
        %v678 = vadd.f32 %v672, %v677
        %v679 = vld [vmem:[%s166 + $0x4] sm:$0x3]
        %s680 = sadd.s32 %s213, 8
        %s681 = sld [smem:[#allocation3 + %s680]]
        %v682 = vstv %s681
        %v683 = vmul.f32 %v682, %v679
        %v684 = vadd.f32 %v678, %v683
        %v685 = vld [vmem:[%s166 + $0x6] sm:$0x3]
        %s686 = sadd.s32 %s220, 8
        %s687 = sld [smem:[#allocation3 + %s686]]
        %v688 = vstv %s687
        %v689 = vmul.f32 %v688, %v685
        %v690 = vadd.f32 %v684, %v689
        %v692 = vlaneseq
        %v693 = vshrl.u32 %v692, 7
        %v694 = vsub.s32 0, %v693
        %v695 = vrot.slane %v690, %v694
        %v696 = vlaneseq
        %v697 = vshrl.u32 %v696, 7
        %v698 = vsub.s32 1, %v697
        %v699 = vrot.slane %v690, %v698
        %702 = vrot.lane.b32.xlu0 %v695, 94
        %v703 = vpop.permute.xlu0 %702
        %704 = vrot.lane.b32.xlu0 %v699, 94
        %v705 = vpop.permute.xlu0 %704
        %vm706 = vcmp.lt.s32.totalorder %v271, 94
        %v707 = vsel %vm706, %v703, %v705
        %v708 = vsel %vm706, %v705, %v703
        %v709 = vld [vmem:[#allocation2] sm:$0x3]
        %v712 = vcombine.low %v707, %v708
        %v714 = vunpack.c.l.s4 1966171168
        %v715 = vunpack.c.0.s8 %v714
        %v716 = vlaneseq
        %v717 = vshrl.u32 %v716, 7
        %v718 = vsub.s32 %v715, %v717
        %v719 = vrot.slane %v712, %v718
        %v721 = vunpack.c.l.s4 1966171168
        %v722 = vunpack.c.0.s8 %v721
        %v723 = vlaneseq
        %v724 = vshrl.u32 %v723, 7
        %v725 = vsub.s32 %v722, %v724
        %v726 = vrot.slane %v719, %v725
        %v728 = vadd.f32 %v709, %v726
        %729 = vst.msk [vmem:[#allocation2] sm:$0x3] %vm230, %v728
        // Predicated region
        $region41: #{tpu_custom_call.1} parent=27 // pred_check
          %p730 = pneg %p190
        $region42: #{tpu_custom_call.1} parent=27 // pred_check_branch
          %732 = sbr.rel (%p730) target = $region44
        $region43: #{tpu_custom_call.1} parent=27 // pred_region
          %v733 = vld [vmem:[#allocation2] sm:$0x3]
          %v734 = vmul.f32 %v733, 0.5
          %v735 = vmul.f32 %v733, 0.70710677
          %v736 = verf.f32.pop %v735
          %v737 = vadd.f32 %v736, 1.0
          %v738 = vmul.f32 %v734, %v737
          %739 = vst.msk [vmem:[%s187] sm:$0x3] %vm230, %v738
        $region44: #{tpu_custom_call.1} parent=27 // pred_fallthru
          _
        %s740 = sand.u32 %s89, 1
        %s741 = scalar_lea.sflag [#allocation5], %s740
        %s742 = sand.u32 %s89, 1
        %s743 = smul.addr %s742, 2
        %s744 = scalar_lea.vmem [#allocation8], %s743
        // Predicated region
        $region45: #{tpu_custom_call.1} parent=27 // pred_check
          %p745 = pneg %p99
        $region46: #{tpu_custom_call.1} parent=27 // pred_check_branch
          %747 = sbr.rel (%p745) target = $region48
        $region47: #{tpu_custom_call.1} parent=27 // pred_region
          %s749 = ssub.s32 32, 32
          %750 = vsyncadd %s741, %s749
          %s751 = smul.addr %s24, 2
          %s752 = smul.addr %s751, 16
          %s753 = scalar_lea.hbm %s2, %s752
          %s755 = sshll.u32 %s744, 4
          %s756 = int_to_ptr.vmem [resolvable:$true] %s755
          %758 = dma.vmem_to_hbm [thread:$0]  %s756, 32, %s753, %s741
        $region48: #{tpu_custom_call.1} parent=27 // pred_fallthru
          _
      $region28: #{tpu_custom_call.1} parent=5 // pred_fallthru
        _
      %p759 = scmp.le.s32.totalorder 2, %s15
      // Predicated region
      $region49: #{tpu_custom_call.1} parent=5 // pred_check
        %p760 = pneg %p759
      $region50: #{tpu_custom_call.1} parent=5 // pred_check_branch
        %762 = sbr.rel (%p760) target = $region52
      $region51: #{tpu_custom_call.1} parent=5 // pred_region
        %s763 = ssub.s32 %s15, 2
        // Predicated region
        $region53: #{tpu_custom_call.1} parent=51 // pred_check
          %p764 = pneg %p105
        $region54: #{tpu_custom_call.1} parent=51 // pred_check_branch
          %766 = sbr.rel (%p764) target = $region56
        $region55: #{tpu_custom_call.1} parent=51 // pred_region
          %s767 = sand.u32 %s90, 1
          %s768 = scalar_lea.sflag [#allocation5], %s767
          %s769 = sand.u32 %s90, 1
          %s770 = smul.addr %s769, 2
          %s771 = scalar_lea.vmem [#allocation8], %s770
          %772 = dma.done %s768, 32
        $region56: #{tpu_custom_call.1} parent=51 // pred_fallthru
          _
      $region52: #{tpu_custom_call.1} parent=5 // pred_fallthru
        _
    $region6: #{tpu_custom_call.1} parent=1 // loop_footer
      %s19 = sadd.s32 1, %s15
    $region7: #{tpu_custom_call.1} parent=1 // loop_footer_branch
      %14 = sbr.rel target = $region3
    $region8: #{tpu_custom_call.1} parent=1 // loop_exit
      _
    %773 = vsyncpa [#allocation4], 1
    %s774 = scalar_lea.sflag [#allocation4], 1
    %775 = vsyncpa %s774, 1
    %776 = vsyncpa [#allocation5], 1
    %s777 = scalar_lea.sflag [#allocation5], 1
    %778 = vsyncpa %s777, 1
    %779 = vsyncpa [#allocation6], 1
    %s780 = scalar_lea.sflag [#allocation6], 1
    %781 = vsyncpa %s780, 1

</llo_original>
